<compile_context>
chip_gen: v7x
topology: tpu7x:2x2x1
jax: 0.10.0
libtpu: 0.0.40
codegen_flags: <defaults>
</compile_context>

<pallas_src>
import functools

import jax
import jax.numpy as jnp
from jax import lax
from jax.experimental import pallas as pl
from jax.experimental.pallas import tpu as pltpu

EPS = 1e-5        # nn.BatchNorm2d default eps
SUBLANE = 8       # f32 sublane granule
LANE = 128        # lane granule


def _round_up(x, m):
    return (x + m - 1) // m * m


def _basic_block_kernel(x_ref, w1_ref, g1_ref, b1_ref, w2_ref, g2_ref, b2_ref,
                        mask_ref, out_ref, *, wp, count):
    """Fused BasicBlock forward on the batched lane layout.

    x_ref   : (C8, N*SpPad) f32   zero-padded frames, one SpPad-lane segment per image
    w*_ref  : (9*C8, C8)    f32   rows ordered (tap, cout); cols = cin
    g*/b*   : (C8, 1)       f32   BN gamma / beta (channels in sublanes)
    mask_ref: (1, N*SpPad)  f32   1.0 on interior pixels, 0.0 on halo / dead lanes
    out_ref : (C8, N*SpPad) f32   (wrapper strips halo / dead lanes / dummy channels)
    """
    c8, nl = x_ref.shape
    inv_cnt = 1.0 / count
    # tap t = (dy, dx): conv output at lane s sums the tap partial at lane s + off_t
    offsets = [(dy - 1) * wp + (dx - 1) for dy in range(3) for dx in range(3)]
    mask = mask_ref[...]                       # (1, NL); broadcasts over sublanes

    def conv_bn(w_ref, g_ref, b_ref, xin):
        # One MXU push for the whole batch (f32 operands, f32 accumulation).
        y = jnp.dot(w_ref[...], xin, preferred_element_type=jnp.float32)  # (9*C8, NL)
        acc = None
        for t, off in enumerate(offsets):
            tap = y[t * c8:(t + 1) * c8, :]    # sublane-tile-aligned row slice
            if off != 0:
                # shifted-output accumulation in registers: static XLU lane roll.
                # Interior outputs never read across an image's own segment; wrap
                # only touches halo / dead lanes (masked below).
                tap = pltpu.roll(tap, (-off) % nl, 1)
            acc = tap if acc is None else acc + tap
        am = acc * mask                        # zero halo / dead lanes for the stats
        s1 = jnp.sum(am, axis=1, keepdims=True)
        s2 = jnp.sum(am * am, axis=1, keepdims=True)
        mean = s1 * inv_cnt
        var = s2 * inv_cnt - mean * mean       # biased var (training-mode BN)
        scale = g_ref[...] * lax.rsqrt(var + EPS)        # (C8,1) -- hoisted, once/conv
        shift = b_ref[...] - mean * scale
        return acc * scale + shift

    x = x_ref[...]
    # conv1 -> bn1 -> relu ; halo/dead lanes re-zeroed so conv2 sees a clean frame
    h1 = jnp.maximum(conv_bn(w1_ref, g1_ref, b1_ref, x), 0.0) * mask
    # conv2 -> bn2 -> + identity residual -> relu (residual reuses the same slab)
    y2 = conv_bn(w2_ref, g2_ref, b2_ref, h1) + x
    out_ref[...] = jnp.maximum(y2, 0.0) * mask


def basic_block_pallas(x_nchw, w1_hwio, g1, b1, w2_hwio, g2, b2):
    """NCHW in / NCHW out.  Weights in HWIO (PyTorch OIHW -> w.permute(2, 3, 1, 0))."""
    N, C, H, W = x_nchw.shape
    assert w1_hwio.shape[-1] == C and w2_hwio.shape[-1] == C, \
        "identity residual requires inplanes == planes"
    Hp, Wp = H + 2, W + 2
    Sp = Hp * Wp
    C8 = _round_up(C, SUBLANE)            # sublane granule only
    SpPad = _round_up(Sp, LANE)           # lane-dense per-image segment (324 -> 384)
    NL = N * SpPad

    # ---- layout plumbing (plain JAX glue).
    # TODO(synk): keep this padded lane-dense layout as the inter-block format to
    # avoid the pad/slice HBM round-trips at real sizes.
    xp = jnp.pad(x_nchw.astype(jnp.float32),
                 ((0, 0), (0, C8 - C), (1, 1), (1, 1))).reshape(N, C8, Sp)
    xp = jnp.pad(xp, ((0, 0), (0, 0), (0, SpPad - Sp)))
    xq = jnp.transpose(xp, (1, 0, 2)).reshape(C8, NL)

    def pack_w(w_hwio):
        wpad = jnp.pad(w_hwio.astype(jnp.float32),
                       ((0, 0), (0, 0), (0, C8 - C), (0, C8 - C)))
        # (dy,dx,ci,co) -> rows (dy*3+dx)*C8 + co, cols ci
        return jnp.transpose(wpad, (0, 1, 3, 2)).reshape(9 * C8, C8)

    def pack_p(p):
        return jnp.pad(p.astype(jnp.float32), (0, C8 - C)).reshape(C8, 1)

    w1p, w2p = pack_w(w1_hwio), pack_w(w2_hwio)
    g1p, b1p, g2p, b2p = pack_p(g1), pack_p(b1), pack_p(g2), pack_p(b2)

    row = (jnp.arange(Hp) >= 1) & (jnp.arange(Hp) <= H)
    col = (jnp.arange(Wp) >= 1) & (jnp.arange(Wp) <= W)
    m = (row[:, None] & col[None, :]).reshape(Sp)
    m = jnp.pad(m, (0, SpPad - Sp))
    mask = jnp.tile(m, (N,)).reshape(1, NL).astype(jnp.float32)

    spec = lambda s: pl.BlockSpec(s, lambda i: (0, 0))

    out = pl.pallas_call(
        functools.partial(_basic_block_kernel, wp=Wp, count=N * H * W),
        out_shape=jax.ShapeDtypeStruct((C8, NL), jnp.float32),
        grid_spec=pltpu.PrefetchScalarGridSpec(
            num_scalar_prefetch=0,
            grid=(1,),
            in_specs=[
                spec((C8, NL)),           # x (batched padded frames)
                spec((9 * C8, C8)),       # conv1 weights
                spec((C8, 1)),            # bn1 gamma
                spec((C8, 1)),            # bn1 beta
                spec((9 * C8, C8)),       # conv2 weights
                spec((C8, 1)),            # bn2 gamma
                spec((C8, 1)),            # bn2 beta
                spec((1, NL)),            # interior mask
            ],
            out_specs=spec((C8, NL)),
        ),
        compiler_params=pltpu.CompilerParams(
            dimension_semantics=("arbitrary",)),
    )(xq, w1p, g1p, b1p, w2p, g2p, b2p, mask)

    # strip dead lanes + spatial halo + dummy channels -> NCHW
    o = out.reshape(C8, N, SpPad)[:, :, :Sp].reshape(C8, N, Hp, Wp)
    return jnp.transpose(o[:C, :, 1:H + 1, 1:W + 1], (1, 0, 2, 3))


def basic_block_reference(x_nchw, w1_hwio, g1, b1, w2_hwio, g2, b2):
    """Pure-JAX reference mirroring the PyTorch forward (training-mode BN)."""
    x = jnp.transpose(x_nchw, (0, 2, 3, 1)).astype(jnp.float32)

    def conv(a, w):
        return lax.conv_general_dilated(
            a, w, window_strides=(1, 1), padding=((1, 1), (1, 1)),
            dimension_numbers=("NHWC", "HWIO", "NHWC"))

    def bn(a, g, b):
        mean = a.mean(axis=(0, 1, 2), keepdims=True)
        var = ((a - mean) ** 2).mean(axis=(0, 1, 2), keepdims=True)
        return (a - mean) * lax.rsqrt(var + EPS) * g + b

    hmid = jnp.maximum(bn(conv(x, w1_hwio), g1, b1), 0.0)
    o = jnp.maximum(bn(conv(hmid, w2_hwio), g2, b2) + x, 0.0)
    return jnp.transpose(o, (0, 3, 1, 2))


if __name__ == "__main__":
    # Small shapes consistent with BasicBlock(inplanes=4, planes=4)
    N, C, H, W = 2, 4, 16, 16

    key = jax.random.PRNGKey(0)
    k_x, k_w1, k_w2, k_g1, k_b1, k_g2, k_b2 = jax.random.split(key, 7)

    x = jax.random.normal(k_x, (N, C, H, W), jnp.float32)
    # conv weights in HWIO (PyTorch stores OIHW; this is the transposed layout)
    w1 = jax.random.normal(k_w1, (3, 3, C, C), jnp.float32) * 0.1
    w2 = jax.random.normal(k_w2, (3, 3, C, C), jnp.float32) * 0.1
    g1 = 1.0 + 0.1 * jax.random.normal(k_g1, (C,), jnp.float32)
    b1 = 0.1 * jax.random.normal(k_b1, (C,), jnp.float32)
    g2 = 1.0 + 0.1 * jax.random.normal(k_g2, (C,), jnp.float32)
    b2 = 0.1 * jax.random.normal(k_b2, (C,), jnp.float32)

    out = jax.block_until_ready(basic_block_pallas(x, w1, g1, b1, w2, g2, b2))
    ref = jax.block_until_ready(basic_block_reference(x, w1, g1, b1, w2, g2, b2))

    assert out.shape == (N, C, H, W), out.shape
    max_err = float(jnp.max(jnp.abs(out - ref)))
    # f32 matmul operands (f32 accumulation); tolerance kept conservative in case the
    # default matmul precision rounds operands to bf16 passes on some generations.
    assert max_err < 5e-2, f"max abs error too large: {max_err}"

    print("KERNEL_OK")
</pallas_src>

<mosaic_0001>
module attributes {stable_mosaic.version = 11 : i64} {
  func.func @_basic_block_kernel(%arg0: i32, %arg1: memref<8x768xf32, #tpu.memory_space<vmem>>, %arg2: memref<72x8xf32, #tpu.memory_space<vmem>>, %arg3: memref<8x1xf32, #tpu.memory_space<vmem>>, %arg4: memref<8x1xf32, #tpu.memory_space<vmem>>, %arg5: memref<72x8xf32, #tpu.memory_space<vmem>>, %arg6: memref<8x1xf32, #tpu.memory_space<vmem>>, %arg7: memref<8x1xf32, #tpu.memory_space<vmem>>, %arg8: memref<1x768xf32, #tpu.memory_space<vmem>>, %arg9: memref<8x768xf32, #tpu.memory_space<vmem>>) attributes {dimension_semantics = [#tpu.dimension_semantics<arbitrary>], iteration_bounds = array<i64: 1>, scalar_prefetch = 0 : i64, scratch_operands = 0 : i64, tpu.core_type = #tpu.core_type<tc>, window_params = [{pipeline_mode = #tpu.pipeline_mode<synchronous>, transform_indices = @transform_0, window_bounds = array<i64: 8, 768>}, {pipeline_mode = #tpu.pipeline_mode<synchronous>, transform_indices = @transform_1, window_bounds = array<i64: 72, 8>}, {pipeline_mode = #tpu.pipeline_mode<synchronous>, transform_indices = @transform_2, window_bounds = array<i64: 8, 1>}, {pipeline_mode = #tpu.pipeline_mode<synchronous>, transform_indices = @transform_3, window_bounds = array<i64: 8, 1>}, {pipeline_mode = #tpu.pipeline_mode<synchronous>, transform_indices = @transform_4, window_bounds = array<i64: 72, 8>}, {pipeline_mode = #tpu.pipeline_mode<synchronous>, transform_indices = @transform_5, window_bounds = array<i64: 8, 1>}, {pipeline_mode = #tpu.pipeline_mode<synchronous>, transform_indices = @transform_6, window_bounds = array<i64: 8, 1>}, {pipeline_mode = #tpu.pipeline_mode<synchronous>, transform_indices = @transform_7, window_bounds = array<i64: 1, 768>}, {pipeline_mode = #tpu.pipeline_mode<synchronous>, transform_indices = @transform_8, window_bounds = array<i64: 8, 768>}]} {
    %c0 = arith.constant 0 : index
    %c0_0 = arith.constant 0 : index
    %0 = vector.load %arg8[%c0, %c0_0] : memref<1x768xf32, #tpu.memory_space<vmem>>, vector<1x768xf32>
    %c0_1 = arith.constant 0 : index
    %c0_2 = arith.constant 0 : index
    %1 = vector.load %arg1[%c0_1, %c0_2] : memref<8x768xf32, #tpu.memory_space<vmem>>, vector<8x768xf32>
    %c0_3 = arith.constant 0 : index
    %c0_4 = arith.constant 0 : index
    %2 = vector.load %arg2[%c0_3, %c0_4] : memref<72x8xf32, #tpu.memory_space<vmem>>, vector<72x8xf32>
    %cst = arith.constant dense<0.000000e+00> : vector<72x768xf32>
    %3 = tpu.matmul %2, %1, %cst {dimension_numbers = #tpu.dot_dimension_numbers<[1], [0], [0], [1], [0, 0, 1, 1], [], []>} : vector<72x8xf32>, vector<8x768xf32>, vector<72x768xf32> -> vector<72x768xf32>
    %4 = vector.extract_strided_slice %3 {offsets = [0, 0], sizes = [8, 768], strides = [1, 1]} : vector<72x768xf32> to vector<8x768xf32>
    %c19_i32 = arith.constant 19 : i32
    %5 = tpu.dynamic_rotate %4 by %c19_i32 dim 1 : vector<8x768xf32>, i32 -> vector<8x768xf32>
    %6 = vector.extract_strided_slice %3 {offsets = [8, 0], sizes = [8, 768], strides = [1, 1]} : vector<72x768xf32> to vector<8x768xf32>
    %c18_i32 = arith.constant 18 : i32
    %7 = tpu.dynamic_rotate %6 by %c18_i32 dim 1 : vector<8x768xf32>, i32 -> vector<8x768xf32>
    %8 = arith.addf %5, %7 : vector<8x768xf32>
    %9 = vector.extract_strided_slice %3 {offsets = [16, 0], sizes = [8, 768], strides = [1, 1]} : vector<72x768xf32> to vector<8x768xf32>
    %c17_i32 = arith.constant 17 : i32
    %10 = tpu.dynamic_rotate %9 by %c17_i32 dim 1 : vector<8x768xf32>, i32 -> vector<8x768xf32>
    %11 = arith.addf %8, %10 : vector<8x768xf32>
    %12 = vector.extract_strided_slice %3 {offsets = [24, 0], sizes = [8, 768], strides = [1, 1]} : vector<72x768xf32> to vector<8x768xf32>
    %c1_i32 = arith.constant 1 : i32
    %13 = tpu.dynamic_rotate %12 by %c1_i32 dim 1 : vector<8x768xf32>, i32 -> vector<8x768xf32>
    %14 = arith.addf %11, %13 : vector<8x768xf32>
    %15 = vector.extract_strided_slice %3 {offsets = [32, 0], sizes = [8, 768], strides = [1, 1]} : vector<72x768xf32> to vector<8x768xf32>
    %16 = arith.addf %14, %15 : vector<8x768xf32>
    %17 = vector.extract_strided_slice %3 {offsets = [40, 0], sizes = [8, 768], strides = [1, 1]} : vector<72x768xf32> to vector<8x768xf32>
    %c767_i32 = arith.constant 767 : i32
    %18 = tpu.dynamic_rotate %17 by %c767_i32 dim 1 : vector<8x768xf32>, i32 -> vector<8x768xf32>
    %19 = arith.addf %16, %18 : vector<8x768xf32>
    %20 = vector.extract_strided_slice %3 {offsets = [48, 0], sizes = [8, 768], strides = [1, 1]} : vector<72x768xf32> to vector<8x768xf32>
    %c751_i32 = arith.constant 751 : i32
    %21 = tpu.dynamic_rotate %20 by %c751_i32 dim 1 : vector<8x768xf32>, i32 -> vector<8x768xf32>
    %22 = arith.addf %19, %21 : vector<8x768xf32>
    %23 = vector.extract_strided_slice %3 {offsets = [56, 0], sizes = [8, 768], strides = [1, 1]} : vector<72x768xf32> to vector<8x768xf32>
    %c750_i32 = arith.constant 750 : i32
    %24 = tpu.dynamic_rotate %23 by %c750_i32 dim 1 : vector<8x768xf32>, i32 -> vector<8x768xf32>
    %25 = arith.addf %22, %24 : vector<8x768xf32>
    %26 = vector.extract_strided_slice %3 {offsets = [64, 0], sizes = [8, 768], strides = [1, 1]} : vector<72x768xf32> to vector<8x768xf32>
    %c749_i32 = arith.constant 749 : i32
    %27 = tpu.dynamic_rotate %26 by %c749_i32 dim 1 : vector<8x768xf32>, i32 -> vector<8x768xf32>
    %28 = arith.addf %25, %27 : vector<8x768xf32>
    %29 = vector.broadcast %0 : vector<1x768xf32> to vector<8x768xf32>
    %30 = arith.mulf %28, %29 : vector<8x768xf32>
    %cst_5 = arith.constant dense<0.000000e+00> : vector<8xf32>
    %31 = vector.multi_reduction <add>, %30, %cst_5 [1] : vector<8x768xf32> to vector<8xf32>
    %32 = vector.shape_cast %31 : vector<8xf32> to vector<8x1xf32>
    %33 = arith.mulf %30, %30 : vector<8x768xf32>
    %cst_6 = arith.constant dense<0.000000e+00> : vector<8xf32>
    %34 = vector.multi_reduction <add>, %33, %cst_6 [1] : vector<8x768xf32> to vector<8xf32>
    %35 = vector.shape_cast %34 : vector<8xf32> to vector<8x1xf32>
    %cst_7 = arith.constant 0.001953125 : f32
    %36 = vector.broadcast %cst_7 : f32 to vector<8x1xf32>
    %37 = arith.mulf %32, %36 : vector<8x1xf32>
    %cst_8 = arith.constant 0.001953125 : f32
    %38 = vector.broadcast %cst_8 : f32 to vector<8x1xf32>
    %39 = arith.mulf %35, %38 : vector<8x1xf32>
    %40 = arith.mulf %37, %37 : vector<8x1xf32>
    %41 = arith.subf %39, %40 : vector<8x1xf32>
    %c0_9 = arith.constant 0 : index
    %c0_10 = arith.constant 0 : index
    %42 = vector.load %arg3[%c0_9, %c0_10] : memref<8x1xf32, #tpu.memory_space<vmem>>, vector<8x1xf32>
    %cst_11 = arith.constant 9.99999974E-6 : f32
    %43 = vector.broadcast %cst_11 : f32 to vector<8x1xf32>
    %44 = arith.addf %41, %43 : vector<8x1xf32>
    %45 = math.rsqrt %44 : vector<8x1xf32>
    %46 = arith.mulf %42, %45 : vector<8x1xf32>
    %c0_12 = arith.constant 0 : index
    %c0_13 = arith.constant 0 : index
    %47 = vector.load %arg4[%c0_12, %c0_13] : memref<8x1xf32, #tpu.memory_space<vmem>>, vector<8x1xf32>
    %48 = arith.mulf %37, %46 : vector<8x1xf32>
    %49 = arith.subf %47, %48 : vector<8x1xf32>
    %50 = vector.broadcast %46 : vector<8x1xf32> to vector<8x768xf32>
    %51 = arith.mulf %28, %50 : vector<8x768xf32>
    %52 = vector.broadcast %49 : vector<8x1xf32> to vector<8x768xf32>
    %53 = arith.addf %51, %52 : vector<8x768xf32>
    %cst_14 = arith.constant 0.000000e+00 : f32
    %54 = vector.broadcast %cst_14 : f32 to vector<8x768xf32>
    %55 = arith.maximumf %53, %54 : vector<8x768xf32>
    %56 = vector.broadcast %0 : vector<1x768xf32> to vector<8x768xf32>
    %57 = arith.mulf %55, %56 : vector<8x768xf32>
    %c0_15 = arith.constant 0 : index
    %c0_16 = arith.constant 0 : index
    %58 = vector.load %arg5[%c0_15, %c0_16] : memref<72x8xf32, #tpu.memory_space<vmem>>, vector<72x8xf32>
    %cst_17 = arith.constant dense<0.000000e+00> : vector<72x768xf32>
    %59 = tpu.matmul %58, %57, %cst_17 {dimension_numbers = #tpu.dot_dimension_numbers<[1], [0], [0], [1], [0, 0, 1, 1], [], []>} : vector<72x8xf32>, vector<8x768xf32>, vector<72x768xf32> -> vector<72x768xf32>
    %60 = vector.extract_strided_slice %59 {offsets = [0, 0], sizes = [8, 768], strides = [1, 1]} : vector<72x768xf32> to vector<8x768xf32>
    %c19_i32_18 = arith.constant 19 : i32
    %61 = tpu.dynamic_rotate %60 by %c19_i32_18 dim 1 : vector<8x768xf32>, i32 -> vector<8x768xf32>
    %62 = vector.extract_strided_slice %59 {offsets = [8, 0], sizes = [8, 768], strides = [1, 1]} : vector<72x768xf32> to vector<8x768xf32>
    %c18_i32_19 = arith.constant 18 : i32
    %63 = tpu.dynamic_rotate %62 by %c18_i32_19 dim 1 : vector<8x768xf32>, i32 -> vector<8x768xf32>
    %64 = arith.addf %61, %63 : vector<8x768xf32>
    %65 = vector.extract_strided_slice %59 {offsets = [16, 0], sizes = [8, 768], strides = [1, 1]} : vector<72x768xf32> to vector<8x768xf32>
    %c17_i32_20 = arith.constant 17 : i32
    %66 = tpu.dynamic_rotate %65 by %c17_i32_20 dim 1 : vector<8x768xf32>, i32 -> vector<8x768xf32>
    %67 = arith.addf %64, %66 : vector<8x768xf32>
    %68 = vector.extract_strided_slice %59 {offsets = [24, 0], sizes = [8, 768], strides = [1, 1]} : vector<72x768xf32> to vector<8x768xf32>
    %c1_i32_21 = arith.constant 1 : i32
    %69 = tpu.dynamic_rotate %68 by %c1_i32_21 dim 1 : vector<8x768xf32>, i32 -> vector<8x768xf32>
    %70 = arith.addf %67, %69 : vector<8x768xf32>
    %71 = vector.extract_strided_slice %59 {offsets = [32, 0], sizes = [8, 768], strides = [1, 1]} : vector<72x768xf32> to vector<8x768xf32>
    %72 = arith.addf %70, %71 : vector<8x768xf32>
    %73 = vector.extract_strided_slice %59 {offsets = [40, 0], sizes = [8, 768], strides = [1, 1]} : vector<72x768xf32> to vector<8x768xf32>
    %c767_i32_22 = arith.constant 767 : i32
    %74 = tpu.dynamic_rotate %73 by %c767_i32_22 dim 1 : vector<8x768xf32>, i32 -> vector<8x768xf32>
    %75 = arith.addf %72, %74 : vector<8x768xf32>
    %76 = vector.extract_strided_slice %59 {offsets = [48, 0], sizes = [8, 768], strides = [1, 1]} : vector<72x768xf32> to vector<8x768xf32>
    %c751_i32_23 = arith.constant 751 : i32
    %77 = tpu.dynamic_rotate %76 by %c751_i32_23 dim 1 : vector<8x768xf32>, i32 -> vector<8x768xf32>
    %78 = arith.addf %75, %77 : vector<8x768xf32>
    %79 = vector.extract_strided_slice %59 {offsets = [56, 0], sizes = [8, 768], strides = [1, 1]} : vector<72x768xf32> to vector<8x768xf32>
    %c750_i32_24 = arith.constant 750 : i32
    %80 = tpu.dynamic_rotate %79 by %c750_i32_24 dim 1 : vector<8x768xf32>, i32 -> vector<8x768xf32>
    %81 = arith.addf %78, %80 : vector<8x768xf32>
    %82 = vector.extract_strided_slice %59 {offsets = [64, 0], sizes = [8, 768], strides = [1, 1]} : vector<72x768xf32> to vector<8x768xf32>
    %c749_i32_25 = arith.constant 749 : i32
    %83 = tpu.dynamic_rotate %82 by %c749_i32_25 dim 1 : vector<8x768xf32>, i32 -> vector<8x768xf32>
    %84 = arith.addf %81, %83 : vector<8x768xf32>
    %85 = vector.broadcast %0 : vector<1x768xf32> to vector<8x768xf32>
    %86 = arith.mulf %84, %85 : vector<8x768xf32>
    %cst_26 = arith.constant dense<0.000000e+00> : vector<8xf32>
    %87 = vector.multi_reduction <add>, %86, %cst_26 [1] : vector<8x768xf32> to vector<8xf32>
    %88 = vector.shape_cast %87 : vector<8xf32> to vector<8x1xf32>
    %89 = arith.mulf %86, %86 : vector<8x768xf32>
    %cst_27 = arith.constant dense<0.000000e+00> : vector<8xf32>
    %90 = vector.multi_reduction <add>, %89, %cst_27 [1] : vector<8x768xf32> to vector<8xf32>
    %91 = vector.shape_cast %90 : vector<8xf32> to vector<8x1xf32>
    %cst_28 = arith.constant 0.001953125 : f32
    %92 = vector.broadcast %cst_28 : f32 to vector<8x1xf32>
    %93 = arith.mulf %88, %92 : vector<8x1xf32>
    %cst_29 = arith.constant 0.001953125 : f32
    %94 = vector.broadcast %cst_29 : f32 to vector<8x1xf32>
    %95 = arith.mulf %91, %94 : vector<8x1xf32>
    %96 = arith.mulf %93, %93 : vector<8x1xf32>
    %97 = arith.subf %95, %96 : vector<8x1xf32>
    %c0_30 = arith.constant 0 : index
    %c0_31 = arith.constant 0 : index
    %98 = vector.load %arg6[%c0_30, %c0_31] : memref<8x1xf32, #tpu.memory_space<vmem>>, vector<8x1xf32>
    %cst_32 = arith.constant 9.99999974E-6 : f32
    %99 = vector.broadcast %cst_32 : f32 to vector<8x1xf32>
    %100 = arith.addf %97, %99 : vector<8x1xf32>
    %101 = math.rsqrt %100 : vector<8x1xf32>
    %102 = arith.mulf %98, %101 : vector<8x1xf32>
    %c0_33 = arith.constant 0 : index
    %c0_34 = arith.constant 0 : index
    %103 = vector.load %arg7[%c0_33, %c0_34] : memref<8x1xf32, #tpu.memory_space<vmem>>, vector<8x1xf32>
    %104 = arith.mulf %93, %102 : vector<8x1xf32>
    %105 = arith.subf %103, %104 : vector<8x1xf32>
    %106 = vector.broadcast %102 : vector<8x1xf32> to vector<8x768xf32>
    %107 = arith.mulf %84, %106 : vector<8x768xf32>
    %108 = vector.broadcast %105 : vector<8x1xf32> to vector<8x768xf32>
    %109 = arith.addf %107, %108 : vector<8x768xf32>
    %110 = arith.addf %109, %1 : vector<8x768xf32>
    %cst_35 = arith.constant 0.000000e+00 : f32
    %111 = vector.broadcast %cst_35 : f32 to vector<8x768xf32>
    %112 = arith.maximumf %110, %111 : vector<8x768xf32>
    %113 = vector.broadcast %0 : vector<1x768xf32> to vector<8x768xf32>
    %114 = arith.mulf %112, %113 : vector<8x768xf32>
    %c0_36 = arith.constant 0 : index
    %c0_37 = arith.constant 0 : index
    %115 = vector.load %arg9[%c0_36, %c0_37] : memref<8x768xf32, #tpu.memory_space<vmem>>, vector<8x768xf32>
    tpu.vector_store %arg9[%c0_36, %c0_37], %114 {strides = array<i32>} : memref<8x768xf32, #tpu.memory_space<vmem>>, vector<8x768xf32>,
    return
  }
  func.func @transform_0(%arg0: i32) -> (i32, i32) {
    %c0_i32 = arith.constant 0 : i32
    %c0_i32_0 = arith.constant 0 : i32
    %c0_i32_1 = arith.constant 0 : i32
    return %c0_i32, %c0_i32_0 : i32, i32
  }
  func.func @transform_1(%arg0: i32) -> (i32, i32) {
    %c0_i32 = arith.constant 0 : i32
    %c0_i32_0 = arith.constant 0 : i32
    %c0_i32_1 = arith.constant 0 : i32
    return %c0_i32, %c0_i32_0 : i32, i32
  }
  func.func @transform_2(%arg0: i32) -> (i32, i32) {
    %c0_i32 = arith.constant 0 : i32
    %c0_i32_0 = arith.constant 0 : i32
    %c0_i32_1 = arith.constant 0 : i32
    return %c0_i32, %c0_i32_0 : i32, i32
  }
  func.func @transform_3(%arg0: i32) -> (i32, i32) {
    %c0_i32 = arith.constant 0 : i32
    %c0_i32_0 = arith.constant 0 : i32
    %c0_i32_1 = arith.constant 0 : i32
    return %c0_i32, %c0_i32_0 : i32, i32
  }
  func.func @transform_4(%arg0: i32) -> (i32, i32) {
    %c0_i32 = arith.constant 0 : i32
    %c0_i32_0 = arith.constant 0 : i32
    %c0_i32_1 = arith.constant 0 : i32
    return %c0_i32, %c0_i32_0 : i32, i32
  }
  func.func @transform_5(%arg0: i32) -> (i32, i32) {
    %c0_i32 = arith.constant 0 : i32
    %c0_i32_0 = arith.constant 0 : i32
    %c0_i32_1 = arith.constant 0 : i32
    return %c0_i32, %c0_i32_0 : i32, i32
  }
  func.func @transform_6(%arg0: i32) -> (i32, i32) {
    %c0_i32 = arith.constant 0 : i32
    %c0_i32_0 = arith.constant 0 : i32
    %c0_i32_1 = arith.constant 0 : i32
    return %c0_i32, %c0_i32_0 : i32, i32
  }
  func.func @transform_7(%arg0: i32) -> (i32, i32) {
    %c0_i32 = arith.constant 0 : i32
    %c0_i32_0 = arith.constant 0 : i32
    %c0_i32_1 = arith.constant 0 : i32
    return %c0_i32, %c0_i32_0 : i32, i32
  }
  func.func @transform_8(%arg0: i32) -> (i32, i32) {
    %c0_i32 = arith.constant 0 : i32
    %c0_i32_0 = arith.constant 0 : i32
    %c0_i32_1 = arith.constant 0 : i32
    return %c0_i32, %c0_i32_0 : i32, i32
  }
}

</mosaic_0001>

<llo_original>
// kernel: tpu_custom_call.1
$region0: #{tpu_custom_call.1}
  #allocation0 [shape = 'u32[]', space=smem, size = 0x4, offset = 0x4, fixed_abs, tag = 'smem constant byte address 0x4 - core index']
  #allocation1 [shape = 'u32[144,128]{1,0:T(1,128)}', space=vmem, size = 0x12000, scoped, tag = 'internal scratch']
  %s0 = inlined_call_operand.vmem [shape: f32[8,768], index: 0, kind: input, shape index: {}]
  %s1 = inlined_call_operand.vmem [shape: f32[72,8], index: 1, kind: input, shape index: {}]
  %s2 = inlined_call_operand.vmem [shape: f32[8,1], index: 2, kind: input, shape index: {}]
  %s3 = inlined_call_operand.vmem [shape: f32[8,1], index: 3, kind: input, shape index: {}]
  %s4 = inlined_call_operand.vmem [shape: f32[72,8], index: 4, kind: input, shape index: {}]
  %s5 = inlined_call_operand.vmem [shape: f32[8,1], index: 5, kind: input, shape index: {}]
  %s6 = inlined_call_operand.vmem [shape: f32[8,1], index: 6, kind: input, shape index: {}]
  %s7 = inlined_call_operand.vmem [shape: f32[1,768], index: 7, kind: input, shape index: {}]
  %s8 = inlined_call_operand.hbm [shape: f32[8,768], index: 8, kind: output, shape index: {}]
  %s9 = sld [smem:[#allocation0]]
  $region42: #{tpu_custom_call.1} parent=0
    _
  %s11 = ssub.s32 1, %s9
  %s12 = scalar_select 0, %s11, %s9
  $region1: #{tpu_custom_call.1} parent=0
    #allocation2 [shape = 'u8[24576]{0}', space=vmem, size = 0x6000, scoped, tag = 'output window, operand 0, single buffered']
    #allocation3 [shape = 's32[1]{0}', space=sflag, size = 0x4, scoped, tag = 'scoped memory for tpu_custom_call.1']
    %13 = vsyncpa [#allocation3], 0
    // Predicated region
    $region2: #{tpu_custom_call.1} parent=1 // pred_check
      _
    $region3: #{tpu_custom_call.1} parent=1 // pred_check_branch
      %15 = sbr.rel (0) target = $region5
    $region4: #{tpu_custom_call.1} parent=1 // pred_region
      _
    $region5: #{tpu_custom_call.1} parent=1 // pred_fallthru
      _
    // Predicated region
    $region6: #{tpu_custom_call.1} parent=1 // pred_check
      _
    $region7: #{tpu_custom_call.1} parent=1 // pred_check_branch
      %17 = sbr.rel (0) target = $region9
    $region8: #{tpu_custom_call.1} parent=1 // pred_region
      _
    $region9: #{tpu_custom_call.1} parent=1 // pred_fallthru
      _
    // Predicated region
    $region10: #{tpu_custom_call.1} parent=1 // pred_check
      _
    $region11: #{tpu_custom_call.1} parent=1 // pred_check_branch
      %19 = sbr.rel (0) target = $region13
    $region12: #{tpu_custom_call.1} parent=1 // pred_region
      _
    $region13: #{tpu_custom_call.1} parent=1 // pred_fallthru
      _
    // Predicated region
    $region14: #{tpu_custom_call.1} parent=1 // pred_check
      _
    $region15: #{tpu_custom_call.1} parent=1 // pred_check_branch
      %21 = sbr.rel (0) target = $region17
    $region16: #{tpu_custom_call.1} parent=1 // pred_region
      _
    $region17: #{tpu_custom_call.1} parent=1 // pred_fallthru
      _
    // Predicated region
    $region18: #{tpu_custom_call.1} parent=1 // pred_check
      _
    $region19: #{tpu_custom_call.1} parent=1 // pred_check_branch
      %23 = sbr.rel (0) target = $region21
    $region20: #{tpu_custom_call.1} parent=1 // pred_region
      _
    $region21: #{tpu_custom_call.1} parent=1 // pred_fallthru
      _
    // Predicated region
    $region22: #{tpu_custom_call.1} parent=1 // pred_check
      _
    $region23: #{tpu_custom_call.1} parent=1 // pred_check_branch
      %25 = sbr.rel (0) target = $region25
    $region24: #{tpu_custom_call.1} parent=1 // pred_region
      _
    $region25: #{tpu_custom_call.1} parent=1 // pred_fallthru
      _
    // Predicated region
    $region26: #{tpu_custom_call.1} parent=1 // pred_check
      _
    $region27: #{tpu_custom_call.1} parent=1 // pred_check_branch
      %27 = sbr.rel (0) target = $region29
    $region28: #{tpu_custom_call.1} parent=1 // pred_region
      _
    $region29: #{tpu_custom_call.1} parent=1 // pred_fallthru
      _
    // Predicated region
    $region30: #{tpu_custom_call.1} parent=1 // pred_check
      _
    $region31: #{tpu_custom_call.1} parent=1 // pred_check_branch
      %29 = sbr.rel (0) target = $region33
    $region32: #{tpu_custom_call.1} parent=1 // pred_region
      _
    $region33: #{tpu_custom_call.1} parent=1 // pred_fallthru
      _
    %v30 = vld [vmem:[%s7] sm:$0x3f]
    %v31 = vld [vmem:[%s0] sm:$0xff]
    %v32 = vld [vmem:[%s0 + $0x8] sm:$0xff]
    %v33 = vld [vmem:[%s0 + $0x10] sm:$0xff]
    %v34 = vld [vmem:[%s0 + $0x18] sm:$0xff]
    %v35 = vld [vmem:[%s0 + $0x20] sm:$0xff]
    %v36 = vld [vmem:[%s0 + $0x28] sm:$0xff]
    %v37 = vld [vmem:[%s1] sm:$0xff]
    %v38 = vld [vmem:[%s1 + $0x8] sm:$0xff]
    %v39 = vld [vmem:[%s1 + $0x10] sm:$0xff]
    %v40 = vld [vmem:[%s1 + $0x18] sm:$0xff]
    %v41 = vld [vmem:[%s1 + $0x20] sm:$0xff]
    %v42 = vld [vmem:[%s1 + $0x28] sm:$0xff]
    %v43 = vld [vmem:[%s1 + $0x30] sm:$0xff]
    %v44 = vld [vmem:[%s1 + $0x38] sm:$0xff]
    %v45 = vld [vmem:[%s1 + $0x40] sm:$0xff]
    %vm46 = vcmask 64512
    %v48 = vsel %vm46, %v37, 0
    %v51 = vsel %vm46, %v38, 0
    %v54 = vsel %vm46, %v39, 0
    %v57 = vsel %vm46, %v40, 0
    %v60 = vsel %vm46, %v41, 0
    %v63 = vsel %vm46, %v42, 0
    %v66 = vsel %vm46, %v43, 0
    %v69 = vsel %vm46, %v44, 0
    %v72 = vsel %vm46, %v45, 0
    %74 = vmatprep.subr.mxu0 %v32
    %75 = vmatpush1.msra.mxu0 %v31
    %76 = vmatprep.subr.mxu0 0.0
    %77 = vmatpush1.msra.mxu0 0.0
    %78 = vmatprep.subr.mxu0 0.0
    %79 = vmatpush1.msra.mxu0 0.0
    %80 = vmatprep.subr.mxu0 0.0
    %81 = vmatpush1.msra.mxu0 0.0
    %82 = vmatprep.subr.mxu0 0.0
    %83 = vmatpush1.msra.mxu0 0.0
    %84 = vmatprep.subr.mxu0 0.0
    %85 = vmatpush1.msra.mxu0 0.0
    %86 = vmatprep.subr.mxu0 0.0
    %87 = vmatpush1.msra.mxu0 0.0
    %88 = vmatprep.subr.mxu0 0.0
    %89 = vmatpush1.msra.mxu0 0.0
    %90 = vmatprep.subr.mxu0 0.0
    %91 = vmatpush1.msra.mxu0 0.0
    %92 = vmatprep.subr.mxu0 0.0
    %93 = vmatpush1.msra.mxu0 0.0
    %94 = vmatprep.subr.mxu0 0.0
    %95 = vmatpush1.msra.mxu0 0.0
    %96 = vmatprep.subr.mxu0 0.0
    %97 = vmatpush1.msra.mxu0 0.0
    %98 = vmatprep.subr.mxu0 0.0
    %99 = vmatpush1.msra.mxu0 0.0
    %100 = vmatprep.subr.mxu0 0.0
    %101 = vmatpush1.msra.mxu0 0.0
    %102 = vmatprep.subr.mxu0 0.0
    %103 = vmatpush1.msra.mxu0 0.0
    %104 = vmatprep.subr.mxu0 0.0
    %105 = vmatpush1.msra.mxu0 0.0
    %106 = vmatprep.subr.mxu0 0.0
    %107 = vmatpush1.msra.mxu0 0.0
    %108 = vmatprep.subr.mxu0 0.0
    %109 = vmatpush1.msra.mxu0 0.0
    %110 = vmatprep.subr.mxu0 0.0
    %111 = vmatpush1.msra.mxu0 0.0
    %112 = vmatprep.subr.mxu0 0.0
    %113 = vmatpush1.msra.mxu0 0.0
    %114 = vmatprep.subr.mxu0 0.0
    %115 = vmatpush1.msra.mxu0 0.0
    %116 = vmatprep.subr.mxu0 0.0
    %117 = vmatpush1.msra.mxu0 0.0
    %118 = vmatprep.subr.mxu0 0.0
    %119 = vmatpush1.msra.mxu0 0.0
    %120 = vmatprep.subr.mxu0 0.0
    %121 = vmatpush1.msra.mxu0 0.0
    %122 = vmatprep.subr.mxu0 0.0
    %123 = vmatpush1.msra.mxu0 0.0
    %124 = vmatprep.subr.mxu0 0.0
    %125 = vmatpush1.msra.mxu0 0.0
    %126 = vmatprep.subr.mxu0 0.0
    %127 = vmatpush1.msra.mxu0 0.0
    %128 = vmatprep.subr.mxu0 0.0
    %129 = vmatpush1.msra.mxu0 0.0
    %130 = vmatprep.subr.mxu0 0.0
    %131 = vmatpush1.msra.mxu0 0.0
    %132 = vmatprep.subr.mxu0 0.0
    %133 = vmatpush1.msra.mxu0 0.0
    %134 = vmatprep.subr.mxu0 0.0
    %135 = vmatpush1.msra.mxu0 0.0
    %136 = vmatprep.subr.mxu0 0.0
    %137 = vmatpush1.msra.mxu0 0.0
    %138 = vmatprep.mubr.f32.mxu0 0.0
    %139 = vmatmul.mubr.f32.gmra.mrb[0].mxu0 %v48
    %v140 = vpop.f32.mrb[0].mxu0
    %v141 = vadd.f32 0.0, %v140
    %v142 = vpop.f32.mrb[0].mxu0
    %v143 = vadd.f32 0.0, %v142
    %144 = vmatprep.mubr.f32.mxu0 0.0
    %145 = vmatmul.mubr.f32.gmra.mrb[0].mxu0 %v51
    %v146 = vpop.f32.mrb[0].mxu0
    %v147 = vadd.f32 0.0, %v146
    %v148 = vpop.f32.mrb[0].mxu0
    %v149 = vadd.f32 0.0, %v148
    %150 = vmatprep.mubr.f32.mxu0 0.0
    %151 = vmatmul.mubr.f32.gmra.mrb[0].mxu0 %v54
    %v152 = vpop.f32.mrb[0].mxu0
    %v153 = vadd.f32 0.0, %v152
    %v154 = vpop.f32.mrb[0].mxu0
    %v155 = vadd.f32 0.0, %v154
    %156 = vmatprep.mubr.f32.mxu0 0.0
    %157 = vmatmul.mubr.f32.gmra.mrb[0].mxu0 %v57
    %v158 = vpop.f32.mrb[0].mxu0
    %v159 = vadd.f32 0.0, %v158
    %v160 = vpop.f32.mrb[0].mxu0
    %v161 = vadd.f32 0.0, %v160
    %162 = vmatprep.mubr.f32.mxu0 0.0
    %163 = vmatmul.mubr.f32.gmra.mrb[0].mxu0 %v60
    %v164 = vpop.f32.mrb[0].mxu0
    %v165 = vadd.f32 0.0, %v164
    %v166 = vpop.f32.mrb[0].mxu0
    %v167 = vadd.f32 0.0, %v166
    %168 = vmatprep.mubr.f32.mxu0 0.0
    %169 = vmatmul.mubr.f32.gmra.mrb[0].mxu0 %v63
    %v170 = vpop.f32.mrb[0].mxu0
    %v171 = vadd.f32 0.0, %v170
    %v172 = vpop.f32.mrb[0].mxu0
    %v173 = vadd.f32 0.0, %v172
    %174 = vmatprep.mubr.f32.mxu0 0.0
    %175 = vmatmul.mubr.f32.gmra.mrb[0].mxu0 %v66
    %v176 = vpop.f32.mrb[0].mxu0
    %v177 = vadd.f32 0.0, %v176
    %v178 = vpop.f32.mrb[0].mxu0
    %v179 = vadd.f32 0.0, %v178
    %180 = vmatprep.mubr.f32.mxu0 0.0
    %181 = vmatmul.mubr.f32.gmra.mrb[0].mxu0 %v69
    %v182 = vpop.f32.mrb[0].mxu0
    %v183 = vadd.f32 0.0, %v182
    %v184 = vpop.f32.mrb[0].mxu0
    %v185 = vadd.f32 0.0, %v184
    %186 = vmatprep.mubr.f32.mxu0 0.0
    %187 = vmatmul.mubr.f32.gmra.mrb[0].mxu0 %v72
    %v188 = vpop.f32.mrb[0].mxu0
    %v189 = vadd.f32 0.0, %v188
    %v190 = vpop.f32.mrb[0].mxu0
    %v191 = vadd.f32 0.0, %v190
    %192 = vdwg.mxu0
    %193 = vmatprep.subr.mxu0 %v34
    %194 = vmatpush1.msra.mxu0 %v33
    %195 = vmatprep.subr.mxu0 0.0
    %196 = vmatpush1.msra.mxu0 0.0
    %197 = vmatprep.subr.mxu0 0.0
    %198 = vmatpush1.msra.mxu0 0.0
    %199 = vmatprep.subr.mxu0 0.0
    %200 = vmatpush1.msra.mxu0 0.0
    %201 = vmatprep.subr.mxu0 0.0
    %202 = vmatpush1.msra.mxu0 0.0
    %203 = vmatprep.subr.mxu0 0.0
    %204 = vmatpush1.msra.mxu0 0.0
    %205 = vmatprep.subr.mxu0 0.0
    %206 = vmatpush1.msra.mxu0 0.0
    %207 = vmatprep.subr.mxu0 0.0
    %208 = vmatpush1.msra.mxu0 0.0
    %209 = vmatprep.subr.mxu0 0.0
    %210 = vmatpush1.msra.mxu0 0.0
    %211 = vmatprep.subr.mxu0 0.0
    %212 = vmatpush1.msra.mxu0 0.0
    %213 = vmatprep.subr.mxu0 0.0
    %214 = vmatpush1.msra.mxu0 0.0
    %215 = vmatprep.subr.mxu0 0.0
    %216 = vmatpush1.msra.mxu0 0.0
    %217 = vmatprep.subr.mxu0 0.0
    %218 = vmatpush1.msra.mxu0 0.0
    %219 = vmatprep.subr.mxu0 0.0
    %220 = vmatpush1.msra.mxu0 0.0
    %221 = vmatprep.subr.mxu0 0.0
    %222 = vmatpush1.msra.mxu0 0.0
    %223 = vmatprep.subr.mxu0 0.0
    %224 = vmatpush1.msra.mxu0 0.0
    %225 = vmatprep.subr.mxu0 0.0
    %226 = vmatpush1.msra.mxu0 0.0
    %227 = vmatprep.subr.mxu0 0.0
    %228 = vmatpush1.msra.mxu0 0.0
    %229 = vmatprep.subr.mxu0 0.0
    %230 = vmatpush1.msra.mxu0 0.0
    %231 = vmatprep.subr.mxu0 0.0
    %232 = vmatpush1.msra.mxu0 0.0
    %233 = vmatprep.subr.mxu0 0.0
    %234 = vmatpush1.msra.mxu0 0.0
    %235 = vmatprep.subr.mxu0 0.0
    %236 = vmatpush1.msra.mxu0 0.0
    %237 = vmatprep.subr.mxu0 0.0
    %238 = vmatpush1.msra.mxu0 0.0
    %239 = vmatprep.subr.mxu0 0.0
    %240 = vmatpush1.msra.mxu0 0.0
    %241 = vmatprep.subr.mxu0 0.0
    %242 = vmatpush1.msra.mxu0 0.0
    %243 = vmatprep.subr.mxu0 0.0
    %244 = vmatpush1.msra.mxu0 0.0
    %245 = vmatprep.subr.mxu0 0.0
    %246 = vmatpush1.msra.mxu0 0.0
    %247 = vmatprep.subr.mxu0 0.0
    %248 = vmatpush1.msra.mxu0 0.0
    %249 = vmatprep.subr.mxu0 0.0
    %250 = vmatpush1.msra.mxu0 0.0
    %251 = vmatprep.subr.mxu0 0.0
    %252 = vmatpush1.msra.mxu0 0.0
    %253 = vmatprep.subr.mxu0 0.0
    %254 = vmatpush1.msra.mxu0 0.0
    %255 = vmatprep.subr.mxu0 0.0
    %256 = vmatpush1.msra.mxu0 0.0
    %257 = vmatprep.mubr.f32.mxu0 0.0
    %258 = vmatmul.mubr.f32.gmra.mrb[0].mxu0 %v48
    %v259 = vpop.f32.mrb[0].mxu0
    %v260 = vadd.f32 0.0, %v259
    %v261 = vpop.f32.mrb[0].mxu0
    %v262 = vadd.f32 0.0, %v261
    %263 = vmatprep.mubr.f32.mxu0 0.0
    %264 = vmatmul.mubr.f32.gmra.mrb[0].mxu0 %v51
    %v265 = vpop.f32.mrb[0].mxu0
    %v266 = vadd.f32 0.0, %v265
    %v267 = vpop.f32.mrb[0].mxu0
    %v268 = vadd.f32 0.0, %v267
    %269 = vmatprep.mubr.f32.mxu0 0.0
    %270 = vmatmul.mubr.f32.gmra.mrb[0].mxu0 %v54
    %v271 = vpop.f32.mrb[0].mxu0
    %v272 = vadd.f32 0.0, %v271
    %v273 = vpop.f32.mrb[0].mxu0
    %v274 = vadd.f32 0.0, %v273
    %275 = vmatprep.mubr.f32.mxu0 0.0
    %276 = vmatmul.mubr.f32.gmra.mrb[0].mxu0 %v57
    %v277 = vpop.f32.mrb[0].mxu0
    %v278 = vadd.f32 0.0, %v277
    %v279 = vpop.f32.mrb[0].mxu0
    %v280 = vadd.f32 0.0, %v279
    %281 = vmatprep.mubr.f32.mxu0 0.0
    %282 = vmatmul.mubr.f32.gmra.mrb[0].mxu0 %v60
    %v283 = vpop.f32.mrb[0].mxu0
    %v284 = vadd.f32 0.0, %v283
    %v285 = vpop.f32.mrb[0].mxu0
    %v286 = vadd.f32 0.0, %v285
    %287 = vmatprep.mubr.f32.mxu0 0.0
    %288 = vmatmul.mubr.f32.gmra.mrb[0].mxu0 %v63
    %v289 = vpop.f32.mrb[0].mxu0
    %v290 = vadd.f32 0.0, %v289
    %v291 = vpop.f32.mrb[0].mxu0
    %v292 = vadd.f32 0.0, %v291
    %293 = vmatprep.mubr.f32.mxu0 0.0
    %294 = vmatmul.mubr.f32.gmra.mrb[0].mxu0 %v66
    %v295 = vpop.f32.mrb[0].mxu0
    %v296 = vadd.f32 0.0, %v295
    %v297 = vpop.f32.mrb[0].mxu0
    %v298 = vadd.f32 0.0, %v297
    %299 = vmatprep.mubr.f32.mxu0 0.0
    %300 = vmatmul.mubr.f32.gmra.mrb[0].mxu0 %v69
    %v301 = vpop.f32.mrb[0].mxu0
    %v302 = vadd.f32 0.0, %v301
    %v303 = vpop.f32.mrb[0].mxu0
    %v304 = vadd.f32 0.0, %v303
    %305 = vmatprep.mubr.f32.mxu0 0.0
    %306 = vmatmul.mubr.f32.gmra.mrb[0].mxu0 %v72
    %v307 = vpop.f32.mrb[0].mxu0
    %v308 = vadd.f32 0.0, %v307
    %v309 = vpop.f32.mrb[0].mxu0
    %v310 = vadd.f32 0.0, %v309
    %311 = vdwg.mxu0
    %312 = vmatprep.subr.mxu0 %v36
    %313 = vmatpush1.msra.mxu0 %v35
    %314 = vmatprep.subr.mxu0 0.0
    %315 = vmatpush1.msra.mxu0 0.0
    %316 = vmatprep.subr.mxu0 0.0
    %317 = vmatpush1.msra.mxu0 0.0
    %318 = vmatprep.subr.mxu0 0.0
    %319 = vmatpush1.msra.mxu0 0.0
    %320 = vmatprep.subr.mxu0 0.0
    %321 = vmatpush1.msra.mxu0 0.0
    %322 = vmatprep.subr.mxu0 0.0
    %323 = vmatpush1.msra.mxu0 0.0
    %324 = vmatprep.subr.mxu0 0.0
    %325 = vmatpush1.msra.mxu0 0.0
    %326 = vmatprep.subr.mxu0 0.0
    %327 = vmatpush1.msra.mxu0 0.0
    %328 = vmatprep.subr.mxu0 0.0
    %329 = vmatpush1.msra.mxu0 0.0
    %330 = vmatprep.subr.mxu0 0.0
    %331 = vmatpush1.msra.mxu0 0.0
    %332 = vmatprep.subr.mxu0 0.0
    %333 = vmatpush1.msra.mxu0 0.0
    %334 = vmatprep.subr.mxu0 0.0
    %335 = vmatpush1.msra.mxu0 0.0
    %336 = vmatprep.subr.mxu0 0.0
    %337 = vmatpush1.msra.mxu0 0.0
    %338 = vmatprep.subr.mxu0 0.0
    %339 = vmatpush1.msra.mxu0 0.0
    %340 = vmatprep.subr.mxu0 0.0
    %341 = vmatpush1.msra.mxu0 0.0
    %342 = vmatprep.subr.mxu0 0.0
    %343 = vmatpush1.msra.mxu0 0.0
    %344 = vmatprep.subr.mxu0 0.0
    %345 = vmatpush1.msra.mxu0 0.0
    %346 = vmatprep.subr.mxu0 0.0
    %347 = vmatpush1.msra.mxu0 0.0
    %348 = vmatprep.subr.mxu0 0.0
    %349 = vmatpush1.msra.mxu0 0.0
    %350 = vmatprep.subr.mxu0 0.0
    %351 = vmatpush1.msra.mxu0 0.0
    %352 = vmatprep.subr.mxu0 0.0
    %353 = vmatpush1.msra.mxu0 0.0
    %354 = vmatprep.subr.mxu0 0.0
    %355 = vmatpush1.msra.mxu0 0.0
    %356 = vmatprep.subr.mxu0 0.0
    %357 = vmatpush1.msra.mxu0 0.0
    %358 = vmatprep.subr.mxu0 0.0
    %359 = vmatpush1.msra.mxu0 0.0
    %360 = vmatprep.subr.mxu0 0.0
    %361 = vmatpush1.msra.mxu0 0.0
    %362 = vmatprep.subr.mxu0 0.0
    %363 = vmatpush1.msra.mxu0 0.0
    %364 = vmatprep.subr.mxu0 0.0
    %365 = vmatpush1.msra.mxu0 0.0
    %366 = vmatprep.subr.mxu0 0.0
    %367 = vmatpush1.msra.mxu0 0.0
    %368 = vmatprep.subr.mxu0 0.0
    %369 = vmatpush1.msra.mxu0 0.0
    %370 = vmatprep.subr.mxu0 0.0
    %371 = vmatpush1.msra.mxu0 0.0
    %372 = vmatprep.subr.mxu0 0.0
    %373 = vmatpush1.msra.mxu0 0.0
    %374 = vmatprep.subr.mxu0 0.0
    %375 = vmatpush1.msra.mxu0 0.0
    %376 = vmatprep.mubr.f32.mxu0 0.0
    %377 = vmatmul.mubr.f32.gmra.mrb[0].mxu0 %v48
    %v378 = vpop.f32.mrb[0].mxu0
    %v379 = vadd.f32 0.0, %v378
    %v380 = vpop.f32.mrb[0].mxu0
    %v381 = vadd.f32 0.0, %v380
    %382 = vmatprep.mubr.f32.mxu0 0.0
    %383 = vmatmul.mubr.f32.gmra.mrb[0].mxu0 %v51
    %v384 = vpop.f32.mrb[0].mxu0
    %v385 = vadd.f32 0.0, %v384
    %v386 = vpop.f32.mrb[0].mxu0
    %v387 = vadd.f32 0.0, %v386
    %388 = vmatprep.mubr.f32.mxu0 0.0
    %389 = vmatmul.mubr.f32.gmra.mrb[0].mxu0 %v54
    %v390 = vpop.f32.mrb[0].mxu0
    %v391 = vadd.f32 0.0, %v390
    %v392 = vpop.f32.mrb[0].mxu0
    %v393 = vadd.f32 0.0, %v392
    %394 = vmatprep.mubr.f32.mxu0 0.0
    %395 = vmatmul.mubr.f32.gmra.mrb[0].mxu0 %v57
    %v396 = vpop.f32.mrb[0].mxu0
    %v397 = vadd.f32 0.0, %v396
    %v398 = vpop.f32.mrb[0].mxu0
    %v399 = vadd.f32 0.0, %v398
    %400 = vmatprep.mubr.f32.mxu0 0.0
    %401 = vmatmul.mubr.f32.gmra.mrb[0].mxu0 %v60
    %v402 = vpop.f32.mrb[0].mxu0
    %v403 = vadd.f32 0.0, %v402
    %v404 = vpop.f32.mrb[0].mxu0
    %v405 = vadd.f32 0.0, %v404
    %406 = vmatprep.mubr.f32.mxu0 0.0
    %407 = vmatmul.mubr.f32.gmra.mrb[0].mxu0 %v63
    %v408 = vpop.f32.mrb[0].mxu0
    %v409 = vadd.f32 0.0, %v408
    %v410 = vpop.f32.mrb[0].mxu0
    %v411 = vadd.f32 0.0, %v410
    %412 = vmatprep.mubr.f32.mxu0 0.0
    %413 = vmatmul.mubr.f32.gmra.mrb[0].mxu0 %v66
    %v414 = vpop.f32.mrb[0].mxu0
    %v415 = vadd.f32 0.0, %v414
    %v416 = vpop.f32.mrb[0].mxu0
    %v417 = vadd.f32 0.0, %v416
    %418 = vmatprep.mubr.f32.mxu0 0.0
    %419 = vmatmul.mubr.f32.gmra.mrb[0].mxu0 %v69
    %v420 = vpop.f32.mrb[0].mxu0
    %v421 = vadd.f32 0.0, %v420
    %v422 = vpop.f32.mrb[0].mxu0
    %v423 = vadd.f32 0.0, %v422
    %424 = vmatprep.mubr.f32.mxu0 0.0
    %425 = vmatmul.mubr.f32.gmra.mrb[0].mxu0 %v72
    %v426 = vpop.f32.mrb[0].mxu0
    %v427 = vadd.f32 0.0, %v426
    %v428 = vpop.f32.mrb[0].mxu0
    %v429 = vadd.f32 0.0, %v428
    %430 = vdwg.mxu0
    %431 = vrot.lane.b32.xlu0 %v141, 19
    %v432 = vpop.permute.xlu0 %431
    %433 = vrot.lane.b32.xlu0 %v143, 19
    %v434 = vpop.permute.xlu0 %433
    %435 = vrot.lane.b32.xlu0 %v260, 19
    %v436 = vpop.permute.xlu0 %435
    %437 = vrot.lane.b32.xlu0 %v262, 19
    %v438 = vpop.permute.xlu0 %437
    %439 = vrot.lane.b32.xlu0 %v379, 19
    %v440 = vpop.permute.xlu0 %439
    %441 = vrot.lane.b32.xlu0 %v381, 19
    %v442 = vpop.permute.xlu0 %441
    %v443 = vlaneseq
    %v444 = vand.u32 %v443, 127
    %vm445 = vcmp.lt.s32.totalorder %v444, 19
    %v446 = vsel %vm445, %v440, %v442
    %v447 = vsel %vm445, %v438, %v440
    %v448 = vsel %vm445, %v436, %v438
    %v449 = vsel %vm445, %v434, %v436
    %v450 = vsel %vm445, %v432, %v434
    %v451 = vsel %vm445, %v442, %v432
    %452 = vrot.lane.b32.xlu0 %v147, 18
    %v453 = vpop.permute.xlu0 %452
    %454 = vrot.lane.b32.xlu0 %v149, 18
    %v455 = vpop.permute.xlu0 %454
    %456 = vrot.lane.b32.xlu0 %v266, 18
    %v457 = vpop.permute.xlu0 %456
    %458 = vrot.lane.b32.xlu0 %v268, 18
    %v459 = vpop.permute.xlu0 %458
    %460 = vrot.lane.b32.xlu0 %v385, 18
    %v461 = vpop.permute.xlu0 %460
    %462 = vrot.lane.b32.xlu0 %v387, 18
    %v463 = vpop.permute.xlu0 %462
    %vm464 = vcmp.lt.s32.totalorder %v444, 18
    %v465 = vsel %vm464, %v461, %v463
    %v466 = vsel %vm464, %v459, %v461
    %v467 = vsel %vm464, %v457, %v459
    %v468 = vsel %vm464, %v455, %v457
    %v469 = vsel %vm464, %v453, %v455
    %v470 = vsel %vm464, %v463, %v453
    %v471 = vadd.f32 %v451, %v470
    %v472 = vadd.f32 %v450, %v469
    %v473 = vadd.f32 %v449, %v468
    %v474 = vadd.f32 %v448, %v467
    %v475 = vadd.f32 %v447, %v466
    %v476 = vadd.f32 %v446, %v465
    %477 = vrot.lane.b32.xlu0 %v153, 17
    %v478 = vpop.permute.xlu0 %477
    %479 = vrot.lane.b32.xlu0 %v155, 17
    %v480 = vpop.permute.xlu0 %479
    %481 = vrot.lane.b32.xlu0 %v272, 17
    %v482 = vpop.permute.xlu0 %481
    %483 = vrot.lane.b32.xlu0 %v274, 17
    %v484 = vpop.permute.xlu0 %483
    %485 = vrot.lane.b32.xlu0 %v391, 17
    %v486 = vpop.permute.xlu0 %485
    %487 = vrot.lane.b32.xlu0 %v393, 17
    %v488 = vpop.permute.xlu0 %487
    %vm489 = vcmp.lt.s32.totalorder %v444, 17
    %v490 = vsel %vm489, %v486, %v488
    %v491 = vsel %vm489, %v484, %v486
    %v492 = vsel %vm489, %v482, %v484
    %v493 = vsel %vm489, %v480, %v482
    %v494 = vsel %vm489, %v478, %v480
    %v495 = vsel %vm489, %v488, %v478
    %v496 = vadd.f32 %v471, %v495
    %v497 = vadd.f32 %v472, %v494
    %v498 = vadd.f32 %v473, %v493
    %v499 = vadd.f32 %v474, %v492
    %v500 = vadd.f32 %v475, %v491
    %v501 = vadd.f32 %v476, %v490
    %502 = vrot.lane.b32.xlu0 %v159, 1
    %v503 = vpop.permute.xlu0 %502
    %504 = vrot.lane.b32.xlu0 %v161, 1
    %v505 = vpop.permute.xlu0 %504
    %506 = vrot.lane.b32.xlu0 %v278, 1
    %v507 = vpop.permute.xlu0 %506
    %508 = vrot.lane.b32.xlu0 %v280, 1
    %v509 = vpop.permute.xlu0 %508
    %510 = vrot.lane.b32.xlu0 %v397, 1
    %v511 = vpop.permute.xlu0 %510
    %512 = vrot.lane.b32.xlu0 %v399, 1
    %v513 = vpop.permute.xlu0 %512
    %vm514 = vcmp.lt.s32.totalorder %v444, 1
    %v515 = vsel %vm514, %v511, %v513
    %v516 = vsel %vm514, %v509, %v511
    %v517 = vsel %vm514, %v507, %v509
    %v518 = vsel %vm514, %v505, %v507
    %v519 = vsel %vm514, %v503, %v505
    %v520 = vsel %vm514, %v513, %v503
    %v521 = vadd.f32 %v496, %v520
    %v522 = vadd.f32 %v497, %v519
    %v523 = vadd.f32 %v498, %v518
    %v524 = vadd.f32 %v499, %v517
    %v525 = vadd.f32 %v500, %v516
    %v526 = vadd.f32 %v501, %v515
    %v527 = vadd.f32 %v521, %v165
    %v528 = vadd.f32 %v522, %v167
    %v529 = vadd.f32 %v523, %v284
    %v530 = vadd.f32 %v524, %v286
    %v531 = vadd.f32 %v525, %v403
    %v532 = vadd.f32 %v526, %v405
    %533 = vrot.lane.b32.xlu0 %v171, 127
    %v534 = vpop.permute.xlu0 %533
    %535 = vrot.lane.b32.xlu0 %v173, 127
    %v536 = vpop.permute.xlu0 %535
    %537 = vrot.lane.b32.xlu0 %v290, 127
    %v538 = vpop.permute.xlu0 %537
    %539 = vrot.lane.b32.xlu0 %v292, 127
    %v540 = vpop.permute.xlu0 %539
    %541 = vrot.lane.b32.xlu0 %v409, 127
    %v542 = vpop.permute.xlu0 %541
    %543 = vrot.lane.b32.xlu0 %v411, 127
    %v544 = vpop.permute.xlu0 %543
    %vm545 = vcmp.lt.s32.totalorder %v444, 127
    %v546 = vsel %vm545, %v542, %v544
    %v547 = vsel %vm545, %v540, %v542
    %v548 = vsel %vm545, %v538, %v540
    %v549 = vsel %vm545, %v536, %v538
    %v550 = vsel %vm545, %v534, %v536
    %v551 = vsel %vm545, %v544, %v534
    %v552 = vadd.f32 %v527, %v550
    %v553 = vadd.f32 %v528, %v549
    %v554 = vadd.f32 %v529, %v548
    %v555 = vadd.f32 %v530, %v547
    %v556 = vadd.f32 %v531, %v546
    %v557 = vadd.f32 %v532, %v551
    %558 = vrot.lane.b32.xlu0 %v177, 111
    %v559 = vpop.permute.xlu0 %558
    %560 = vrot.lane.b32.xlu0 %v179, 111
    %v561 = vpop.permute.xlu0 %560
    %562 = vrot.lane.b32.xlu0 %v296, 111
    %v563 = vpop.permute.xlu0 %562
    %564 = vrot.lane.b32.xlu0 %v298, 111
    %v565 = vpop.permute.xlu0 %564
    %566 = vrot.lane.b32.xlu0 %v415, 111
    %v567 = vpop.permute.xlu0 %566
    %568 = vrot.lane.b32.xlu0 %v417, 111
    %v569 = vpop.permute.xlu0 %568
    %vm570 = vcmp.lt.s32.totalorder %v444, 111
    %v571 = vsel %vm570, %v567, %v569
    %v572 = vsel %vm570, %v565, %v567
    %v573 = vsel %vm570, %v563, %v565
    %v574 = vsel %vm570, %v561, %v563
    %v575 = vsel %vm570, %v559, %v561
    %v576 = vsel %vm570, %v569, %v559
    %v577 = vadd.f32 %v552, %v575
    %v578 = vadd.f32 %v553, %v574
    %v579 = vadd.f32 %v554, %v573
    %v580 = vadd.f32 %v555, %v572
    %v581 = vadd.f32 %v556, %v571
    %v582 = vadd.f32 %v557, %v576
    %583 = vrot.lane.b32.xlu0 %v183, 110
    %v584 = vpop.permute.xlu0 %583
    %585 = vrot.lane.b32.xlu0 %v185, 110
    %v586 = vpop.permute.xlu0 %585
    %587 = vrot.lane.b32.xlu0 %v302, 110
    %v588 = vpop.permute.xlu0 %587
    %589 = vrot.lane.b32.xlu0 %v304, 110
    %v590 = vpop.permute.xlu0 %589
    %591 = vrot.lane.b32.xlu0 %v421, 110
    %v592 = vpop.permute.xlu0 %591
    %593 = vrot.lane.b32.xlu0 %v423, 110
    %v594 = vpop.permute.xlu0 %593
    %vm595 = vcmp.lt.s32.totalorder %v444, 110
    %v596 = vsel %vm595, %v592, %v594
    %v597 = vsel %vm595, %v590, %v592
    %v598 = vsel %vm595, %v588, %v590
    %v599 = vsel %vm595, %v586, %v588
    %v600 = vsel %vm595, %v584, %v586
    %v601 = vsel %vm595, %v594, %v584
    %v602 = vadd.f32 %v577, %v600
    %v603 = vadd.f32 %v578, %v599
    %v604 = vadd.f32 %v579, %v598
    %v605 = vadd.f32 %v580, %v597
    %v606 = vadd.f32 %v581, %v596
    %v607 = vadd.f32 %v582, %v601
    %608 = vrot.lane.b32.xlu0 %v189, 109
    %v609 = vpop.permute.xlu0 %608
    %610 = vrot.lane.b32.xlu0 %v191, 109
    %v611 = vpop.permute.xlu0 %610
    %612 = vrot.lane.b32.xlu0 %v308, 109
    %v613 = vpop.permute.xlu0 %612
    %614 = vrot.lane.b32.xlu0 %v310, 109
    %v615 = vpop.permute.xlu0 %614
    %616 = vrot.lane.b32.xlu0 %v427, 109
    %v617 = vpop.permute.xlu0 %616
    %618 = vrot.lane.b32.xlu0 %v429, 109
    %v619 = vpop.permute.xlu0 %618
    %vm620 = vcmp.lt.s32.totalorder %v444, 109
    %v621 = vsel %vm620, %v617, %v619
    %v622 = vsel %vm620, %v615, %v617
    %v623 = vsel %vm620, %v613, %v615
    %v624 = vsel %vm620, %v611, %v613
    %v625 = vsel %vm620, %v609, %v611
    %v626 = vsel %vm620, %v619, %v609
    %v627 = vadd.f32 %v602, %v625
    %v628 = vadd.f32 %v603, %v624
    %v629 = vadd.f32 %v604, %v623
    %v630 = vadd.f32 %v605, %v622
    %v631 = vadd.f32 %v606, %v621
    %v632 = vadd.f32 %v607, %v626
    %v634 = vlaneseq
    %v635 = vshrl.u32 %v634, 7
    %v636 = vsub.s32 0, %v635
    %v637 = vrot.slane %v30, %v636
    %v638 = vlaneseq
    %v639 = vshrl.u32 %v638, 7
    %v640 = vsub.s32 1, %v639
    %v641 = vrot.slane %v30, %v640
    %v642 = vlaneseq
    %v643 = vshrl.u32 %v642, 7
    %v644 = vsub.s32 2, %v643
    %v645 = vrot.slane %v30, %v644
    %v646 = vlaneseq
    %v647 = vshrl.u32 %v646, 7
    %v648 = vsub.s32 3, %v647
    %v649 = vrot.slane %v30, %v648
    %v650 = vlaneseq
    %v651 = vshrl.u32 %v650, 7
    %v652 = vsub.s32 4, %v651
    %v653 = vrot.slane %v30, %v652
    %v654 = vlaneseq
    %v655 = vshrl.u32 %v654, 7
    %v656 = vsub.s32 5, %v655
    %v657 = vrot.slane %v30, %v656
    %v664 = vmul.f32 %v627, %v637
    %v665 = vmul.f32 %v628, %v641
    %v666 = vmul.f32 %v629, %v645
    %v667 = vmul.f32 %v630, %v649
    %v668 = vmul.f32 %v631, %v653
    %v669 = vmul.f32 %v632, %v657
    %v670 = vadd.f32 %v664, %v665
    %v671 = vadd.f32 %v670, %v666
    %v672 = vadd.f32 %v671, %v667
    %v673 = vadd.f32 %v672, %v668
    %v674 = vadd.f32 %v673, %v669
    %675 = vadd.xlane.f32.xlu0 %v674
    %v676 = vpop.xlane.xlu0 %675
    %v677 = vmul.f32 %v664, %v664
    %v678 = vmul.f32 %v665, %v665
    %v679 = vmul.f32 %v666, %v666
    %v680 = vmul.f32 %v667, %v667
    %v681 = vmul.f32 %v668, %v668
    %v682 = vmul.f32 %v669, %v669
    %v683 = vadd.f32 %v677, %v678
    %v684 = vadd.f32 %v683, %v679
    %v685 = vadd.f32 %v684, %v680
    %v686 = vadd.f32 %v685, %v681
    %v687 = vadd.f32 %v686, %v682
    %688 = vadd.xlane.f32.xlu0 %v687
    %v689 = vpop.xlane.xlu0 %688
    %v690 = vmul.f32 %v676, 0.001953125
    %v691 = vmul.f32 %v689, 0.001953125
    %v692 = vmul.f32 %v690, %v690
    %v693 = vsub.f32 %v691, %v692
    %v694 = vld [vmem:[%s2] sm:$0xff]
    %v695 = vadd.f32 %v693, 1e-05
    %v696 = vrsqrt.pop %v695
    %v697 = vmul.f32 %v694, %v696
    %v698 = vld [vmem:[%s3] sm:$0xff]
    %v699 = vmul.f32 %v690, %v697
    %v700 = vsub.f32 %v698, %v699
    %702 = vset.pattern.permute.xlu0 0
    %703 = vperm.xlu0 %702, %v697
    %v704 = vpop.permute.xlu0 %703
    %v706 = vmul.f32 %v627, %v704
    %v707 = vmul.f32 %v628, %v704
    %v708 = vmul.f32 %v629, %v704
    %v709 = vmul.f32 %v630, %v704
    %v710 = vmul.f32 %v631, %v704
    %v711 = vmul.f32 %v632, %v704
    %713 = vset.pattern.permute.xlu0 0
    %714 = vperm.xlu0 %713, %v700
    %v715 = vpop.permute.xlu0 %714
    %v717 = vadd.f32 %v706, %v715
    %v718 = vadd.f32 %v707, %v715
    %v719 = vadd.f32 %v708, %v715
    %v720 = vadd.f32 %v709, %v715
    %v721 = vadd.f32 %v710, %v715
    %v722 = vadd.f32 %v711, %v715
    %v723 = vmax.f32 %v717, 0.0
    %v724 = vmax.f32 %v718, 0.0
    %v725 = vmax.f32 %v719, 0.0
    %v726 = vmax.f32 %v720, 0.0
    %v727 = vmax.f32 %v721, 0.0
    %v728 = vmax.f32 %v722, 0.0
    %v729 = vmul.f32 %v723, %v637
    %v730 = vmul.f32 %v724, %v641
    %v731 = vmul.f32 %v725, %v645
    %v732 = vmul.f32 %v726, %v649
    %v733 = vmul.f32 %v727, %v653
    %v734 = vmul.f32 %v728, %v657
    %v735 = vld [vmem:[%s4] sm:$0xff]
    %v736 = vld [vmem:[%s4 + $0x8] sm:$0xff]
    %v737 = vld [vmem:[%s4 + $0x10] sm:$0xff]
    %v738 = vld [vmem:[%s4 + $0x18] sm:$0xff]
    %v739 = vld [vmem:[%s4 + $0x20] sm:$0xff]
    %v740 = vld [vmem:[%s4 + $0x28] sm:$0xff]
    %v741 = vld [vmem:[%s4 + $0x30] sm:$0xff]
    %v742 = vld [vmem:[%s4 + $0x38] sm:$0xff]
    %v743 = vld [vmem:[%s4 + $0x40] sm:$0xff]
    %v745 = vsel %vm46, %v735, 0
    %v748 = vsel %vm46, %v736, 0
    %v751 = vsel %vm46, %v737, 0
    %v754 = vsel %vm46, %v738, 0
    %v757 = vsel %vm46, %v739, 0
    %v760 = vsel %vm46, %v740, 0
    %v763 = vsel %vm46, %v741, 0
    %v766 = vsel %vm46, %v742, 0
    %v769 = vsel %vm46, %v743, 0
    %771 = vmatprep.subr.mxu0 %v730
    %772 = vmatpush1.msra.mxu0 %v729
    %773 = vmatprep.subr.mxu0 0.0
    %774 = vmatpush1.msra.mxu0 0.0
    %775 = vmatprep.subr.mxu0 0.0
    %776 = vmatpush1.msra.mxu0 0.0
    %777 = vmatprep.subr.mxu0 0.0
    %778 = vmatpush1.msra.mxu0 0.0
    %779 = vmatprep.subr.mxu0 0.0
    %780 = vmatpush1.msra.mxu0 0.0
    %781 = vmatprep.subr.mxu0 0.0
    %782 = vmatpush1.msra.mxu0 0.0
    %783 = vmatprep.subr.mxu0 0.0
    %784 = vmatpush1.msra.mxu0 0.0
    %785 = vmatprep.subr.mxu0 0.0
    %786 = vmatpush1.msra.mxu0 0.0
    %787 = vmatprep.subr.mxu0 0.0
    %788 = vmatpush1.msra.mxu0 0.0
    %789 = vmatprep.subr.mxu0 0.0
    %790 = vmatpush1.msra.mxu0 0.0
    %791 = vmatprep.subr.mxu0 0.0
    %792 = vmatpush1.msra.mxu0 0.0
    %793 = vmatprep.subr.mxu0 0.0
    %794 = vmatpush1.msra.mxu0 0.0
    %795 = vmatprep.subr.mxu0 0.0
    %796 = vmatpush1.msra.mxu0 0.0
    %797 = vmatprep.subr.mxu0 0.0
    %798 = vmatpush1.msra.mxu0 0.0
    %799 = vmatprep.subr.mxu0 0.0
    %800 = vmatpush1.msra.mxu0 0.0
    %801 = vmatprep.subr.mxu0 0.0
    %802 = vmatpush1.msra.mxu0 0.0
    %803 = vmatprep.subr.mxu0 0.0
    %804 = vmatpush1.msra.mxu0 0.0
    %805 = vmatprep.subr.mxu0 0.0
    %806 = vmatpush1.msra.mxu0 0.0
    %807 = vmatprep.subr.mxu0 0.0
    %808 = vmatpush1.msra.mxu0 0.0
    %809 = vmatprep.subr.mxu0 0.0
    %810 = vmatpush1.msra.mxu0 0.0
    %811 = vmatprep.subr.mxu0 0.0
    %812 = vmatpush1.msra.mxu0 0.0
    %813 = vmatprep.subr.mxu0 0.0
    %814 = vmatpush1.msra.mxu0 0.0
    %815 = vmatprep.subr.mxu0 0.0
    %816 = vmatpush1.msra.mxu0 0.0
    %817 = vmatprep.subr.mxu0 0.0
    %818 = vmatpush1.msra.mxu0 0.0
    %819 = vmatprep.subr.mxu0 0.0
    %820 = vmatpush1.msra.mxu0 0.0
    %821 = vmatprep.subr.mxu0 0.0
    %822 = vmatpush1.msra.mxu0 0.0
    %823 = vmatprep.subr.mxu0 0.0
    %824 = vmatpush1.msra.mxu0 0.0
    %825 = vmatprep.subr.mxu0 0.0
    %826 = vmatpush1.msra.mxu0 0.0
    %827 = vmatprep.subr.mxu0 0.0
    %828 = vmatpush1.msra.mxu0 0.0
    %829 = vmatprep.subr.mxu0 0.0
    %830 = vmatpush1.msra.mxu0 0.0
    %831 = vmatprep.subr.mxu0 0.0
    %832 = vmatpush1.msra.mxu0 0.0
    %833 = vmatprep.subr.mxu0 0.0
    %834 = vmatpush1.msra.mxu0 0.0
    %835 = vmatprep.mubr.f32.mxu0 0.0
    %836 = vmatmul.mubr.f32.gmra.mrb[0].mxu0 %v745
    %v837 = vpop.f32.mrb[0].mxu0
    %v838 = vadd.f32 0.0, %v837
    %v839 = vpop.f32.mrb[0].mxu0
    %v840 = vadd.f32 0.0, %v839
    %841 = vmatprep.mubr.f32.mxu0 0.0
    %842 = vmatmul.mubr.f32.gmra.mrb[0].mxu0 %v748
    %v843 = vpop.f32.mrb[0].mxu0
    %v844 = vadd.f32 0.0, %v843
    %v845 = vpop.f32.mrb[0].mxu0
    %v846 = vadd.f32 0.0, %v845
    %847 = vmatprep.mubr.f32.mxu0 0.0
    %848 = vmatmul.mubr.f32.gmra.mrb[0].mxu0 %v751
    %v849 = vpop.f32.mrb[0].mxu0
    %v850 = vadd.f32 0.0, %v849
    %v851 = vpop.f32.mrb[0].mxu0
    %v852 = vadd.f32 0.0, %v851
    %853 = vmatprep.mubr.f32.mxu0 0.0
    %854 = vmatmul.mubr.f32.gmra.mrb[0].mxu0 %v754
    %v855 = vpop.f32.mrb[0].mxu0
    %v856 = vadd.f32 0.0, %v855
    %v857 = vpop.f32.mrb[0].mxu0
    %v858 = vadd.f32 0.0, %v857
    %859 = vmatprep.mubr.f32.mxu0 0.0
    %860 = vmatmul.mubr.f32.gmra.mrb[0].mxu0 %v757
    %v861 = vpop.f32.mrb[0].mxu0
    %v862 = vadd.f32 0.0, %v861
    %v863 = vpop.f32.mrb[0].mxu0
    %v864 = vadd.f32 0.0, %v863
    %865 = vmatprep.mubr.f32.mxu0 0.0
    %866 = vmatmul.mubr.f32.gmra.mrb[0].mxu0 %v760
    %v867 = vpop.f32.mrb[0].mxu0
    %v868 = vadd.f32 0.0, %v867
    %v869 = vpop.f32.mrb[0].mxu0
    %v870 = vadd.f32 0.0, %v869
    %871 = vmatprep.mubr.f32.mxu0 0.0
    %872 = vmatmul.mubr.f32.gmra.mrb[0].mxu0 %v763
    %v873 = vpop.f32.mrb[0].mxu0
    %v874 = vadd.f32 0.0, %v873
    %v875 = vpop.f32.mrb[0].mxu0
    %v876 = vadd.f32 0.0, %v875
    %877 = vmatprep.mubr.f32.mxu0 0.0
    %878 = vmatmul.mubr.f32.gmra.mrb[0].mxu0 %v766
    %v879 = vpop.f32.mrb[0].mxu0
    %v880 = vadd.f32 0.0, %v879
    %v881 = vpop.f32.mrb[0].mxu0
    %v882 = vadd.f32 0.0, %v881
    %883 = vmatprep.mubr.f32.mxu0 0.0
    %884 = vmatmul.mubr.f32.gmra.mrb[0].mxu0 %v769
    %v885 = vpop.f32.mrb[0].mxu0
    %v886 = vadd.f32 0.0, %v885
    %v887 = vpop.f32.mrb[0].mxu0
    %v888 = vadd.f32 0.0, %v887
    %889 = vdwg.mxu0
    %890 = vmatprep.subr.mxu0 %v732
    %891 = vmatpush1.msra.mxu0 %v731
    %892 = vmatprep.subr.mxu0 0.0
    %893 = vmatpush1.msra.mxu0 0.0
    %894 = vmatprep.subr.mxu0 0.0
    %895 = vmatpush1.msra.mxu0 0.0
    %896 = vmatprep.subr.mxu0 0.0
    %897 = vmatpush1.msra.mxu0 0.0
    %898 = vmatprep.subr.mxu0 0.0
    %899 = vmatpush1.msra.mxu0 0.0
    %900 = vmatprep.subr.mxu0 0.0
    %901 = vmatpush1.msra.mxu0 0.0
    %902 = vmatprep.subr.mxu0 0.0
    %903 = vmatpush1.msra.mxu0 0.0
    %904 = vmatprep.subr.mxu0 0.0
    %905 = vmatpush1.msra.mxu0 0.0
    %906 = vmatprep.subr.mxu0 0.0
    %907 = vmatpush1.msra.mxu0 0.0
    %908 = vmatprep.subr.mxu0 0.0
    %909 = vmatpush1.msra.mxu0 0.0
    %910 = vmatprep.subr.mxu0 0.0
    %911 = vmatpush1.msra.mxu0 0.0
    %912 = vmatprep.subr.mxu0 0.0
    %913 = vmatpush1.msra.mxu0 0.0
    %914 = vmatprep.subr.mxu0 0.0
    %915 = vmatpush1.msra.mxu0 0.0
    %916 = vmatprep.subr.mxu0 0.0
    %917 = vmatpush1.msra.mxu0 0.0
    %918 = vmatprep.subr.mxu0 0.0
    %919 = vmatpush1.msra.mxu0 0.0
    %920 = vmatprep.subr.mxu0 0.0
    %921 = vmatpush1.msra.mxu0 0.0
    %922 = vmatprep.subr.mxu0 0.0
    %923 = vmatpush1.msra.mxu0 0.0
    %924 = vmatprep.subr.mxu0 0.0
    %925 = vmatpush1.msra.mxu0 0.0
    %926 = vmatprep.subr.mxu0 0.0
    %927 = vmatpush1.msra.mxu0 0.0
    %928 = vmatprep.subr.mxu0 0.0
    %929 = vmatpush1.msra.mxu0 0.0
    %930 = vmatprep.subr.mxu0 0.0
    %931 = vmatpush1.msra.mxu0 0.0
    %932 = vmatprep.subr.mxu0 0.0
    %933 = vmatpush1.msra.mxu0 0.0
    %934 = vmatprep.subr.mxu0 0.0
    %935 = vmatpush1.msra.mxu0 0.0
    %936 = vmatprep.subr.mxu0 0.0
    %937 = vmatpush1.msra.mxu0 0.0
    %938 = vmatprep.subr.mxu0 0.0
    %939 = vmatpush1.msra.mxu0 0.0
    %940 = vmatprep.subr.mxu0 0.0
    %941 = vmatpush1.msra.mxu0 0.0
    %942 = vmatprep.subr.mxu0 0.0
    %943 = vmatpush1.msra.mxu0 0.0
    %944 = vmatprep.subr.mxu0 0.0
    %945 = vmatpush1.msra.mxu0 0.0
    %946 = vmatprep.subr.mxu0 0.0
    %947 = vmatpush1.msra.mxu0 0.0
    %948 = vmatprep.subr.mxu0 0.0
    %949 = vmatpush1.msra.mxu0 0.0
    %950 = vmatprep.subr.mxu0 0.0
    %951 = vmatpush1.msra.mxu0 0.0
    %952 = vmatprep.subr.mxu0 0.0
    %953 = vmatpush1.msra.mxu0 0.0
    %954 = vmatprep.mubr.f32.mxu0 0.0
    %955 = vmatmul.mubr.f32.gmra.mrb[0].mxu0 %v745
    %v956 = vpop.f32.mrb[0].mxu0
    %v957 = vadd.f32 0.0, %v956
    %v958 = vpop.f32.mrb[0].mxu0
    %v959 = vadd.f32 0.0, %v958
    %960 = vmatprep.mubr.f32.mxu0 0.0
    %961 = vmatmul.mubr.f32.gmra.mrb[0].mxu0 %v748
    %v962 = vpop.f32.mrb[0].mxu0
    %v963 = vadd.f32 0.0, %v962
    %v964 = vpop.f32.mrb[0].mxu0
    %v965 = vadd.f32 0.0, %v964
    %966 = vmatprep.mubr.f32.mxu0 0.0
    %967 = vmatmul.mubr.f32.gmra.mrb[0].mxu0 %v751
    %v968 = vpop.f32.mrb[0].mxu0
    %v969 = vadd.f32 0.0, %v968
    %v970 = vpop.f32.mrb[0].mxu0
    %v971 = vadd.f32 0.0, %v970
    %972 = vmatprep.mubr.f32.mxu0 0.0
    %973 = vmatmul.mubr.f32.gmra.mrb[0].mxu0 %v754
    %v974 = vpop.f32.mrb[0].mxu0
    %v975 = vadd.f32 0.0, %v974
    %v976 = vpop.f32.mrb[0].mxu0
    %v977 = vadd.f32 0.0, %v976
    %978 = vmatprep.mubr.f32.mxu0 0.0
    %979 = vmatmul.mubr.f32.gmra.mrb[0].mxu0 %v757
    %v980 = vpop.f32.mrb[0].mxu0
    %v981 = vadd.f32 0.0, %v980
    %v982 = vpop.f32.mrb[0].mxu0
    %v983 = vadd.f32 0.0, %v982
    %984 = vmatprep.mubr.f32.mxu0 0.0
    %985 = vmatmul.mubr.f32.gmra.mrb[0].mxu0 %v760
    %v986 = vpop.f32.mrb[0].mxu0
    %v987 = vadd.f32 0.0, %v986
    %v988 = vpop.f32.mrb[0].mxu0
    %v989 = vadd.f32 0.0, %v988
    %990 = vmatprep.mubr.f32.mxu0 0.0
    %991 = vmatmul.mubr.f32.gmra.mrb[0].mxu0 %v763
    %v992 = vpop.f32.mrb[0].mxu0
    %v993 = vadd.f32 0.0, %v992
    %v994 = vpop.f32.mrb[0].mxu0
    %v995 = vadd.f32 0.0, %v994
    %996 = vmatprep.mubr.f32.mxu0 0.0
    %997 = vmatmul.mubr.f32.gmra.mrb[0].mxu0 %v766
    %v998 = vpop.f32.mrb[0].mxu0
    %v999 = vadd.f32 0.0, %v998
    %v1000 = vpop.f32.mrb[0].mxu0
    %v1001 = vadd.f32 0.0, %v1000
    %1002 = vmatprep.mubr.f32.mxu0 0.0
    %1003 = vmatmul.mubr.f32.gmra.mrb[0].mxu0 %v769
    %v1004 = vpop.f32.mrb[0].mxu0
    %v1005 = vadd.f32 0.0, %v1004
    %v1006 = vpop.f32.mrb[0].mxu0
    %v1007 = vadd.f32 0.0, %v1006
    %1008 = vdwg.mxu0
    %1009 = vmatprep.subr.mxu0 %v734
    %1010 = vmatpush1.msra.mxu0 %v733
    %1011 = vmatprep.subr.mxu0 0.0
    %1012 = vmatpush1.msra.mxu0 0.0
    %1013 = vmatprep.subr.mxu0 0.0
    %1014 = vmatpush1.msra.mxu0 0.0
    %1015 = vmatprep.subr.mxu0 0.0
    %1016 = vmatpush1.msra.mxu0 0.0
    %1017 = vmatprep.subr.mxu0 0.0
    %1018 = vmatpush1.msra.mxu0 0.0
    %1019 = vmatprep.subr.mxu0 0.0
    %1020 = vmatpush1.msra.mxu0 0.0
    %1021 = vmatprep.subr.mxu0 0.0
    %1022 = vmatpush1.msra.mxu0 0.0
    %1023 = vmatprep.subr.mxu0 0.0
    %1024 = vmatpush1.msra.mxu0 0.0
    %1025 = vmatprep.subr.mxu0 0.0
    %1026 = vmatpush1.msra.mxu0 0.0
    %1027 = vmatprep.subr.mxu0 0.0
    %1028 = vmatpush1.msra.mxu0 0.0
    %1029 = vmatprep.subr.mxu0 0.0
    %1030 = vmatpush1.msra.mxu0 0.0
    %1031 = vmatprep.subr.mxu0 0.0
    %1032 = vmatpush1.msra.mxu0 0.0
    %1033 = vmatprep.subr.mxu0 0.0
    %1034 = vmatpush1.msra.mxu0 0.0
    %1035 = vmatprep.subr.mxu0 0.0
    %1036 = vmatpush1.msra.mxu0 0.0
    %1037 = vmatprep.subr.mxu0 0.0
    %1038 = vmatpush1.msra.mxu0 0.0
    %1039 = vmatprep.subr.mxu0 0.0
    %1040 = vmatpush1.msra.mxu0 0.0
    %1041 = vmatprep.subr.mxu0 0.0
    %1042 = vmatpush1.msra.mxu0 0.0
    %1043 = vmatprep.subr.mxu0 0.0
    %1044 = vmatpush1.msra.mxu0 0.0
    %1045 = vmatprep.subr.mxu0 0.0
    %1046 = vmatpush1.msra.mxu0 0.0
    %1047 = vmatprep.subr.mxu0 0.0
    %1048 = vmatpush1.msra.mxu0 0.0
    %1049 = vmatprep.subr.mxu0 0.0
    %1050 = vmatpush1.msra.mxu0 0.0
    %1051 = vmatprep.subr.mxu0 0.0
    %1052 = vmatpush1.msra.mxu0 0.0
    %1053 = vmatprep.subr.mxu0 0.0
    %1054 = vmatpush1.msra.mxu0 0.0
    %1055 = vmatprep.subr.mxu0 0.0
    %1056 = vmatpush1.msra.mxu0 0.0
    %1057 = vmatprep.subr.mxu0 0.0
    %1058 = vmatpush1.msra.mxu0 0.0
    %1059 = vmatprep.subr.mxu0 0.0
    %1060 = vmatpush1.msra.mxu0 0.0
    %1061 = vmatprep.subr.mxu0 0.0
    %1062 = vmatpush1.msra.mxu0 0.0
    %1063 = vmatprep.subr.mxu0 0.0
    %1064 = vmatpush1.msra.mxu0 0.0
    %1065 = vmatprep.subr.mxu0 0.0
    %1066 = vmatpush1.msra.mxu0 0.0
    %1067 = vmatprep.subr.mxu0 0.0
    %1068 = vmatpush1.msra.mxu0 0.0
    %1069 = vmatprep.subr.mxu0 0.0
    %1070 = vmatpush1.msra.mxu0 0.0
    %1071 = vmatprep.subr.mxu0 0.0
    %1072 = vmatpush1.msra.mxu0 0.0
    %1073 = vmatprep.mubr.f32.mxu0 0.0
    %1074 = vmatmul.mubr.f32.gmra.mrb[0].mxu0 %v745
    %v1075 = vpop.f32.mrb[0].mxu0
    %v1076 = vadd.f32 0.0, %v1075
    %v1077 = vpop.f32.mrb[0].mxu0
    %v1078 = vadd.f32 0.0, %v1077
    %1079 = vmatprep.mubr.f32.mxu0 0.0
    %1080 = vmatmul.mubr.f32.gmra.mrb[0].mxu0 %v748
    %v1081 = vpop.f32.mrb[0].mxu0
    %v1082 = vadd.f32 0.0, %v1081
    %v1083 = vpop.f32.mrb[0].mxu0
    %v1084 = vadd.f32 0.0, %v1083
    %1085 = vmatprep.mubr.f32.mxu0 0.0
    %1086 = vmatmul.mubr.f32.gmra.mrb[0].mxu0 %v751
    %v1087 = vpop.f32.mrb[0].mxu0
    %v1088 = vadd.f32 0.0, %v1087
    %v1089 = vpop.f32.mrb[0].mxu0
    %v1090 = vadd.f32 0.0, %v1089
    %1091 = vmatprep.mubr.f32.mxu0 0.0
    %1092 = vmatmul.mubr.f32.gmra.mrb[0].mxu0 %v754
    %v1093 = vpop.f32.mrb[0].mxu0
    %v1094 = vadd.f32 0.0, %v1093
    %v1095 = vpop.f32.mrb[0].mxu0
    %v1096 = vadd.f32 0.0, %v1095
    %1097 = vmatprep.mubr.f32.mxu0 0.0
    %1098 = vmatmul.mubr.f32.gmra.mrb[0].mxu0 %v757
    %v1099 = vpop.f32.mrb[0].mxu0
    %v1100 = vadd.f32 0.0, %v1099
    %v1101 = vpop.f32.mrb[0].mxu0
    %v1102 = vadd.f32 0.0, %v1101
    %1103 = vmatprep.mubr.f32.mxu0 0.0
    %1104 = vmatmul.mubr.f32.gmra.mrb[0].mxu0 %v760
    %v1105 = vpop.f32.mrb[0].mxu0
    %v1106 = vadd.f32 0.0, %v1105
    %v1107 = vpop.f32.mrb[0].mxu0
    %v1108 = vadd.f32 0.0, %v1107
    %1109 = vmatprep.mubr.f32.mxu0 0.0
    %1110 = vmatmul.mubr.f32.gmra.mrb[0].mxu0 %v763
    %v1111 = vpop.f32.mrb[0].mxu0
    %v1112 = vadd.f32 0.0, %v1111
    %v1113 = vpop.f32.mrb[0].mxu0
    %v1114 = vadd.f32 0.0, %v1113
    %1115 = vmatprep.mubr.f32.mxu0 0.0
    %1116 = vmatmul.mubr.f32.gmra.mrb[0].mxu0 %v766
    %v1117 = vpop.f32.mrb[0].mxu0
    %v1118 = vadd.f32 0.0, %v1117
    %v1119 = vpop.f32.mrb[0].mxu0
    %v1120 = vadd.f32 0.0, %v1119
    %1121 = vmatprep.mubr.f32.mxu0 0.0
    %1122 = vmatmul.mubr.f32.gmra.mrb[0].mxu0 %v769
    %v1123 = vpop.f32.mrb[0].mxu0
    %v1124 = vadd.f32 0.0, %v1123
    %v1125 = vpop.f32.mrb[0].mxu0
    %v1126 = vadd.f32 0.0, %v1125
    %1127 = vdwg.mxu0
    %1128 = vrot.lane.b32.xlu0 %v838, 19
    %v1129 = vpop.permute.xlu0 %1128
    %1130 = vrot.lane.b32.xlu0 %v840, 19
    %v1131 = vpop.permute.xlu0 %1130
    %1132 = vrot.lane.b32.xlu0 %v957, 19
    %v1133 = vpop.permute.xlu0 %1132
    %1134 = vrot.lane.b32.xlu0 %v959, 19
    %v1135 = vpop.permute.xlu0 %1134
    %1136 = vrot.lane.b32.xlu0 %v1076, 19
    %v1137 = vpop.permute.xlu0 %1136
    %1138 = vrot.lane.b32.xlu0 %v1078, 19
    %v1139 = vpop.permute.xlu0 %1138
    %v1140 = vsel %vm445, %v1137, %v1139
    %v1141 = vsel %vm445, %v1135, %v1137
    %v1142 = vsel %vm445, %v1133, %v1135
    %v1143 = vsel %vm445, %v1131, %v1133
    %v1144 = vsel %vm445, %v1129, %v1131
    %v1145 = vsel %vm445, %v1139, %v1129
    %1146 = vrot.lane.b32.xlu0 %v844, 18
    %v1147 = vpop.permute.xlu0 %1146
    %1148 = vrot.lane.b32.xlu0 %v846, 18
    %v1149 = vpop.permute.xlu0 %1148
    %1150 = vrot.lane.b32.xlu0 %v963, 18
    %v1151 = vpop.permute.xlu0 %1150
    %1152 = vrot.lane.b32.xlu0 %v965, 18
    %v1153 = vpop.permute.xlu0 %1152
    %1154 = vrot.lane.b32.xlu0 %v1082, 18
    %v1155 = vpop.permute.xlu0 %1154
    %1156 = vrot.lane.b32.xlu0 %v1084, 18
    %v1157 = vpop.permute.xlu0 %1156
    %v1158 = vsel %vm464, %v1155, %v1157
    %v1159 = vsel %vm464, %v1153, %v1155
    %v1160 = vsel %vm464, %v1151, %v1153
    %v1161 = vsel %vm464, %v1149, %v1151
    %v1162 = vsel %vm464, %v1147, %v1149
    %v1163 = vsel %vm464, %v1157, %v1147
    %v1164 = vadd.f32 %v1145, %v1163
    %v1165 = vadd.f32 %v1144, %v1162
    %v1166 = vadd.f32 %v1143, %v1161
    %v1167 = vadd.f32 %v1142, %v1160
    %v1168 = vadd.f32 %v1141, %v1159
    %v1169 = vadd.f32 %v1140, %v1158
    %1170 = vrot.lane.b32.xlu0 %v850, 17
    %v1171 = vpop.permute.xlu0 %1170
    %1172 = vrot.lane.b32.xlu0 %v852, 17
    %v1173 = vpop.permute.xlu0 %1172
    %1174 = vrot.lane.b32.xlu0 %v969, 17
    %v1175 = vpop.permute.xlu0 %1174
    %1176 = vrot.lane.b32.xlu0 %v971, 17
    %v1177 = vpop.permute.xlu0 %1176
    %1178 = vrot.lane.b32.xlu0 %v1088, 17
    %v1179 = vpop.permute.xlu0 %1178
    %1180 = vrot.lane.b32.xlu0 %v1090, 17
    %v1181 = vpop.permute.xlu0 %1180
    %v1182 = vsel %vm489, %v1179, %v1181
    %v1183 = vsel %vm489, %v1177, %v1179
    %v1184 = vsel %vm489, %v1175, %v1177
    %v1185 = vsel %vm489, %v1173, %v1175
    %v1186 = vsel %vm489, %v1171, %v1173
    %v1187 = vsel %vm489, %v1181, %v1171
    %v1188 = vadd.f32 %v1164, %v1187
    %v1189 = vadd.f32 %v1165, %v1186
    %v1190 = vadd.f32 %v1166, %v1185
    %v1191 = vadd.f32 %v1167, %v1184
    %v1192 = vadd.f32 %v1168, %v1183
    %v1193 = vadd.f32 %v1169, %v1182
    %1194 = vrot.lane.b32.xlu0 %v856, 1
    %v1195 = vpop.permute.xlu0 %1194
    %1196 = vrot.lane.b32.xlu0 %v858, 1
    %v1197 = vpop.permute.xlu0 %1196
    %1198 = vrot.lane.b32.xlu0 %v975, 1
    %v1199 = vpop.permute.xlu0 %1198
    %1200 = vrot.lane.b32.xlu0 %v977, 1
    %v1201 = vpop.permute.xlu0 %1200
    %1202 = vrot.lane.b32.xlu0 %v1094, 1
    %v1203 = vpop.permute.xlu0 %1202
    %1204 = vrot.lane.b32.xlu0 %v1096, 1
    %v1205 = vpop.permute.xlu0 %1204
    %v1206 = vsel %vm514, %v1203, %v1205
    %v1207 = vsel %vm514, %v1201, %v1203
    %v1208 = vsel %vm514, %v1199, %v1201
    %v1209 = vsel %vm514, %v1197, %v1199
    %v1210 = vsel %vm514, %v1195, %v1197
    %v1211 = vsel %vm514, %v1205, %v1195
    %v1212 = vadd.f32 %v1188, %v1211
    %v1213 = vadd.f32 %v1189, %v1210
    %v1214 = vadd.f32 %v1190, %v1209
    %v1215 = vadd.f32 %v1191, %v1208
    %v1216 = vadd.f32 %v1192, %v1207
    %v1217 = vadd.f32 %v1193, %v1206
    %v1218 = vadd.f32 %v1212, %v862
    %v1219 = vadd.f32 %v1213, %v864
    %v1220 = vadd.f32 %v1214, %v981
    %v1221 = vadd.f32 %v1215, %v983
    %v1222 = vadd.f32 %v1216, %v1100
    %v1223 = vadd.f32 %v1217, %v1102
    %1224 = vrot.lane.b32.xlu0 %v868, 127
    %v1225 = vpop.permute.xlu0 %1224
    %1226 = vrot.lane.b32.xlu0 %v870, 127
    %v1227 = vpop.permute.xlu0 %1226
    %1228 = vrot.lane.b32.xlu0 %v987, 127
    %v1229 = vpop.permute.xlu0 %1228
    %1230 = vrot.lane.b32.xlu0 %v989, 127
    %v1231 = vpop.permute.xlu0 %1230
    %1232 = vrot.lane.b32.xlu0 %v1106, 127
    %v1233 = vpop.permute.xlu0 %1232
    %1234 = vrot.lane.b32.xlu0 %v1108, 127
    %v1235 = vpop.permute.xlu0 %1234
    %v1236 = vsel %vm545, %v1233, %v1235
    %v1237 = vsel %vm545, %v1231, %v1233
    %v1238 = vsel %vm545, %v1229, %v1231
    %v1239 = vsel %vm545, %v1227, %v1229
    %v1240 = vsel %vm545, %v1225, %v1227
    %v1241 = vsel %vm545, %v1235, %v1225
    %v1242 = vadd.f32 %v1218, %v1240
    %v1243 = vadd.f32 %v1219, %v1239
    %v1244 = vadd.f32 %v1220, %v1238
    %v1245 = vadd.f32 %v1221, %v1237
    %v1246 = vadd.f32 %v1222, %v1236
    %v1247 = vadd.f32 %v1223, %v1241
    %1248 = vrot.lane.b32.xlu0 %v874, 111
    %v1249 = vpop.permute.xlu0 %1248
    %1250 = vrot.lane.b32.xlu0 %v876, 111
    %v1251 = vpop.permute.xlu0 %1250
    %1252 = vrot.lane.b32.xlu0 %v993, 111
    %v1253 = vpop.permute.xlu0 %1252
    %1254 = vrot.lane.b32.xlu0 %v995, 111
    %v1255 = vpop.permute.xlu0 %1254
    %1256 = vrot.lane.b32.xlu0 %v1112, 111
    %v1257 = vpop.permute.xlu0 %1256
    %1258 = vrot.lane.b32.xlu0 %v1114, 111
    %v1259 = vpop.permute.xlu0 %1258
    %v1260 = vsel %vm570, %v1257, %v1259
    %v1261 = vsel %vm570, %v1255, %v1257
    %v1262 = vsel %vm570, %v1253, %v1255
    %v1263 = vsel %vm570, %v1251, %v1253
    %v1264 = vsel %vm570, %v1249, %v1251
    %v1265 = vsel %vm570, %v1259, %v1249
    %v1266 = vadd.f32 %v1242, %v1264
    %v1267 = vadd.f32 %v1243, %v1263
    %v1268 = vadd.f32 %v1244, %v1262
    %v1269 = vadd.f32 %v1245, %v1261
    %v1270 = vadd.f32 %v1246, %v1260
    %v1271 = vadd.f32 %v1247, %v1265
    %1272 = vrot.lane.b32.xlu0 %v880, 110
    %v1273 = vpop.permute.xlu0 %1272
    %1274 = vrot.lane.b32.xlu0 %v882, 110
    %v1275 = vpop.permute.xlu0 %1274
    %1276 = vrot.lane.b32.xlu0 %v999, 110
    %v1277 = vpop.permute.xlu0 %1276
    %1278 = vrot.lane.b32.xlu0 %v1001, 110
    %v1279 = vpop.permute.xlu0 %1278
    %1280 = vrot.lane.b32.xlu0 %v1118, 110
    %v1281 = vpop.permute.xlu0 %1280
    %1282 = vrot.lane.b32.xlu0 %v1120, 110
    %v1283 = vpop.permute.xlu0 %1282
    %v1284 = vsel %vm595, %v1281, %v1283
    %v1285 = vsel %vm595, %v1279, %v1281
    %v1286 = vsel %vm595, %v1277, %v1279
    %v1287 = vsel %vm595, %v1275, %v1277
    %v1288 = vsel %vm595, %v1273, %v1275
    %v1289 = vsel %vm595, %v1283, %v1273
    %v1290 = vadd.f32 %v1266, %v1288
    %v1291 = vadd.f32 %v1267, %v1287
    %v1292 = vadd.f32 %v1268, %v1286
    %v1293 = vadd.f32 %v1269, %v1285
    %v1294 = vadd.f32 %v1270, %v1284
    %v1295 = vadd.f32 %v1271, %v1289
    %1296 = vrot.lane.b32.xlu0 %v886, 109
    %v1297 = vpop.permute.xlu0 %1296
    %1298 = vrot.lane.b32.xlu0 %v888, 109
    %v1299 = vpop.permute.xlu0 %1298
    %1300 = vrot.lane.b32.xlu0 %v1005, 109
    %v1301 = vpop.permute.xlu0 %1300
    %1302 = vrot.lane.b32.xlu0 %v1007, 109
    %v1303 = vpop.permute.xlu0 %1302
    %1304 = vrot.lane.b32.xlu0 %v1124, 109
    %v1305 = vpop.permute.xlu0 %1304
    %1306 = vrot.lane.b32.xlu0 %v1126, 109
    %v1307 = vpop.permute.xlu0 %1306
    %v1308 = vsel %vm620, %v1305, %v1307
    %v1309 = vsel %vm620, %v1303, %v1305
    %v1310 = vsel %vm620, %v1301, %v1303
    %v1311 = vsel %vm620, %v1299, %v1301
    %v1312 = vsel %vm620, %v1297, %v1299
    %v1313 = vsel %vm620, %v1307, %v1297
    %v1314 = vadd.f32 %v1290, %v1312
    %v1315 = vadd.f32 %v1291, %v1311
    %v1316 = vadd.f32 %v1292, %v1310
    %v1317 = vadd.f32 %v1293, %v1309
    %v1318 = vadd.f32 %v1294, %v1308
    %v1319 = vadd.f32 %v1295, %v1313
    %v1320 = vmul.f32 %v1314, %v637
    %v1321 = vmul.f32 %v1315, %v641
    %v1322 = vmul.f32 %v1316, %v645
    %v1323 = vmul.f32 %v1317, %v649
    %v1324 = vmul.f32 %v1318, %v653
    %v1325 = vmul.f32 %v1319, %v657
    %v1326 = vadd.f32 %v1320, %v1321
    %v1327 = vadd.f32 %v1326, %v1322
    %v1328 = vadd.f32 %v1327, %v1323
    %v1329 = vadd.f32 %v1328, %v1324
    %v1330 = vadd.f32 %v1329, %v1325
    %1331 = vadd.xlane.f32.xlu0 %v1330
    %v1332 = vpop.xlane.xlu0 %1331
    %v1333 = vmul.f32 %v1320, %v1320
    %v1334 = vmul.f32 %v1321, %v1321
    %v1335 = vmul.f32 %v1322, %v1322
    %v1336 = vmul.f32 %v1323, %v1323
    %v1337 = vmul.f32 %v1324, %v1324
    %v1338 = vmul.f32 %v1325, %v1325
    %v1339 = vadd.f32 %v1333, %v1334
    %v1340 = vadd.f32 %v1339, %v1335
    %v1341 = vadd.f32 %v1340, %v1336
    %v1342 = vadd.f32 %v1341, %v1337
    %v1343 = vadd.f32 %v1342, %v1338
    %1344 = vadd.xlane.f32.xlu0 %v1343
    %v1345 = vpop.xlane.xlu0 %1344
    %v1346 = vmul.f32 %v1332, 0.001953125
    %v1347 = vmul.f32 %v1345, 0.001953125
    %v1348 = vmul.f32 %v1346, %v1346
    %v1349 = vsub.f32 %v1347, %v1348
    %v1350 = vld [vmem:[%s5] sm:$0xff]
    %v1351 = vadd.f32 %v1349, 1e-05
    %v1352 = vrsqrt.pop %v1351
    %v1353 = vmul.f32 %v1350, %v1352
    %v1354 = vld [vmem:[%s6] sm:$0xff]
    %v1355 = vmul.f32 %v1346, %v1353
    %v1356 = vsub.f32 %v1354, %v1355
    %1358 = vset.pattern.permute.xlu0 0
    %1359 = vperm.xlu0 %1358, %v1353
    %v1360 = vpop.permute.xlu0 %1359
    %v1362 = vmul.f32 %v1314, %v1360
    %v1363 = vmul.f32 %v1315, %v1360
    %v1364 = vmul.f32 %v1316, %v1360
    %v1365 = vmul.f32 %v1317, %v1360
    %v1366 = vmul.f32 %v1318, %v1360
    %v1367 = vmul.f32 %v1319, %v1360
    %1369 = vset.pattern.permute.xlu0 0
    %1370 = vperm.xlu0 %1369, %v1356
    %v1371 = vpop.permute.xlu0 %1370
    %v1373 = vadd.f32 %v1362, %v1371
    %v1374 = vadd.f32 %v1363, %v1371
    %v1375 = vadd.f32 %v1364, %v1371
    %v1376 = vadd.f32 %v1365, %v1371
    %v1377 = vadd.f32 %v1366, %v1371
    %v1378 = vadd.f32 %v1367, %v1371
    %v1379 = vadd.f32 %v1373, %v31
    %v1380 = vadd.f32 %v1374, %v32
    %v1381 = vadd.f32 %v1375, %v33
    %v1382 = vadd.f32 %v1376, %v34
    %v1383 = vadd.f32 %v1377, %v35
    %v1384 = vadd.f32 %v1378, %v36
    %v1385 = vmax.f32 %v1379, 0.0
    %v1386 = vmax.f32 %v1380, 0.0
    %v1387 = vmax.f32 %v1381, 0.0
    %v1388 = vmax.f32 %v1382, 0.0
    %v1389 = vmax.f32 %v1383, 0.0
    %v1390 = vmax.f32 %v1384, 0.0
    %v1391 = vmul.f32 %v1385, %v637
    %v1392 = vmul.f32 %v1386, %v641
    %v1393 = vmul.f32 %v1387, %v645
    %v1394 = vmul.f32 %v1388, %v649
    %v1395 = vmul.f32 %v1389, %v653
    %v1396 = vmul.f32 %v1390, %v657
    %1397 = vst [vmem:[#allocation2] sm:$0xff] %v1391
    %1398 = vst [vmem:[#allocation2 + $0x8] sm:$0xff] %v1392
    %1399 = vst [vmem:[#allocation2 + $0x10] sm:$0xff] %v1393
    %1400 = vst [vmem:[#allocation2 + $0x18] sm:$0xff] %v1394
    %1401 = vst [vmem:[#allocation2 + $0x20] sm:$0xff] %v1395
    %1402 = vst [vmem:[#allocation2 + $0x28] sm:$0xff] %v1396
    // Predicated region
    $region34: #{tpu_custom_call.1} parent=1 // pred_check
      _
    $region35: #{tpu_custom_call.1} parent=1 // pred_check_branch
      %1404 = sbr.rel (0) target = $region37
    $region36: #{tpu_custom_call.1} parent=1 // pred_region
      %s1406 = ssub.s32 768, 768
      %1407 = vsyncadd [#allocation3], %s1406
      %s1409 = sshll.u32 [#allocation2], 4
      %s1410 = int_to_ptr.vmem [resolvable:$true] %s1409
      %1412 = dma.vmem_to_hbm [thread:$0]  %s1410, 768, %s8, [#allocation3]
    $region37: #{tpu_custom_call.1} parent=1 // pred_fallthru
      _
    // Predicated region
    $region38: #{tpu_custom_call.1} parent=1 // pred_check
      _
    $region39: #{tpu_custom_call.1} parent=1 // pred_check_branch
      %1414 = sbr.rel (0) target = $region41
    $region40: #{tpu_custom_call.1} parent=1 // pred_region
      %1415 = dma.done [#allocation3], 768
    $region41: #{tpu_custom_call.1} parent=1 // pred_fallthru
      _
    %1416 = vsyncpa [#allocation3], 1

</llo_original>
